<compile_context>
chip_gen: v6e
topology: v6e:2x2x1
jax: 0.10.0
libtpu: 0.0.40
codegen_flags: <defaults>
</compile_context>

<pallas_src>
import math

import jax
import jax.numpy as jnp
from jax.experimental import pallas as pl
from jax.experimental.pallas import tpu as pltpu


# ------------------------------ fused kernel ------------------------------- #
def _ctc_rec_fused_kernel(xp_ref, pe_w_ref, pos_ref, w1_ref, b1_ref,
                          g_ref, be_ref, w2_ref, b2_ref, out_ref):
    """Fused (H_p-pooled) patch-embed + pos add + CTC head for one batch tile.

    Every input row is already one output token (the H_p mean was folded into
    the wrapper because it commutes with the linear patch embed).  Matmuls use
    bf16 operands with f32 accumulation; LayerNorm/GELU statistics are f32.
    All intermediates stay in VMEM/vregs; only lane-padded logits hit HBM.
    """
    # Pooled patch embedding: (bt*W_p, Pdim_pad) @ (Pdim_pad, C_pad) on the MXU.
    tok = jnp.dot(xp_ref[...], pe_w_ref[...],
                  preferred_element_type=jnp.float32)          # (rows, C_pad) f32
    # + H_p-pooled (pos_embed + conv bias), lane-padded, pre-tiled per batch tile.
    tok = tok + pos_ref[...]

    # Linear(C -> D).
    y = jnp.dot(tok.astype(jnp.bfloat16), w1_ref[...],
                preferred_element_type=jnp.float32) + b1_ref[...]

    # LayerNorm(D, eps=1e-6): biased variance, f32 stats (matches PyTorch).
    mu = jnp.mean(y, axis=-1, keepdims=True)
    var = jnp.mean(jnp.square(y - mu), axis=-1, keepdims=True)
    y = (y - mu) * jax.lax.rsqrt(var + 1e-6)
    y = y * g_ref[...] + be_ref[...]

    # GELU (exact erf form — matches nn.GELU() default).
    y = 0.5 * y * (1.0 + jax.lax.erf(y * 0.7071067811865476))

    # Linear(D -> K_pad); class dim lane-padded to a multiple of 128 so the
    # store is a dense (unmasked) vst.
    logit = jnp.dot(y.astype(jnp.bfloat16), w2_ref[...],
                    preferred_element_type=jnp.float32) + b2_ref[...]
    out_ref[...] = logit.astype(out_ref.dtype)


# ------------------------------ sizing helpers ------------------------------ #
def _round_up(x, m):
    return ((x + m - 1) // m) * m


def _vmem_budget_bytes():
    """Generation-aware VMEM ceiling: ~75% of physical VMEM.

    ~96 MiB on v5e/v6e (128 MiB physical), ~48 MiB on v7x (64 MiB physical).
    """
    phys = 128 * 1024 * 1024
    try:
        info = pltpu.get_tpu_info()
        phys = int(getattr(info, "vmem_capacity_bytes", phys))
    except Exception:
        pass
    return int(phys * 3 // 4)


def _choose_batch_tile(batch, w_p, pdim_pad, c_pad, k_pad, vmem_budget_bytes):
    """Pick a batch tile bt such that:
      * bt*w_p is a multiple of 8 (sublane constraint on the row blocks),
      * the double-buffered streaming tiles fit well inside the VMEM budget,
      * row tiles are large enough to feed the MXU / amortize per-step overhead,
      * the grid keeps >= 2 steps when the batch allows it (software pipelining
        and v7x dual-TensorCore sharding via "parallel" semantics).
    """
    bt_unit = 8 // math.gcd(w_p, 8)
    # Bytes per unit of bt for the streamed operands: pooled patches (bf16) and
    # f32 logits are double-buffered, the pos tile is single-buffered.
    per_bt = w_p * (2 * pdim_pad * 2 + 2 * k_pad * 4 + c_pad * 4)
    cap_vmem = max(bt_unit,
                   ((vmem_budget_bytes // 2) // max(per_bt, 1)) // bt_unit * bt_unit)
    cap_rows = max(bt_unit, (512 // max(w_p, 1)) // bt_unit * bt_unit)
    if batch >= 2 * bt_unit:
        cap_grid = max(bt_unit, (batch // 2) // bt_unit * bt_unit)
    else:
        cap_grid = bt_unit
    return max(bt_unit, min(cap_vmem, cap_rows, cap_grid))


# ------------------------------ pallas_call glue ---------------------------- #
def _const_spec(shape, single_buffer):
    if single_buffer:
        # Grid-invariant operand: one VMEM buffer is enough.
        return pl.BlockSpec(shape, lambda i: (0, 0), pipeline_mode=pl.Buffered(1))
    return pl.BlockSpec(shape, lambda i: (0, 0))


def ctc_rec_fused_call(xp_flat, pe_w, pos_tile, w1, b1, ln_g, ln_b, w2p, b2p,
                       *, bt, w_p, vmem_limit_bytes, single_buffer_consts):
    rows, pdim_pad = xp_flat.shape
    b_pad = rows // w_p
    c_pad = pe_w.shape[1]
    d = w1.shape[1]
    k_pad = w2p.shape[1]
    grid = (b_pad // bt,)
    return pl.pallas_call(
        _ctc_rec_fused_kernel,
        out_shape=jax.ShapeDtypeStruct((b_pad * w_p, k_pad), jnp.float32),
        grid=grid,
        in_specs=[
            # Only the per-tile pooled patches stream through the pipeline
            # (double-buffered); everything else is grid-invariant.
            pl.BlockSpec((bt * w_p, pdim_pad), lambda i: (i, 0)),  # patches (bf16)
            _const_spec((pdim_pad, c_pad), single_buffer_consts),  # patch-embed W (bf16)
            _const_spec((bt * w_p, c_pad), single_buffer_consts),  # pooled pos+bias (f32)
            _const_spec((c_pad, d), single_buffer_consts),         # head W1 (bf16)
            _const_spec((1, d), single_buffer_consts),             # head b1
            _const_spec((1, d), single_buffer_consts),             # LN gamma
            _const_spec((1, d), single_buffer_consts),             # LN beta
            _const_spec((d, k_pad), single_buffer_consts),         # head W2 padded (bf16)
            _const_spec((1, k_pad), single_buffer_consts),         # head b2 padded
        ],
        out_specs=pl.BlockSpec((bt * w_p, k_pad), lambda i: (i, 0)),
        compiler_params=pltpu.CompilerParams(
            dimension_semantics=("parallel",),   # shards grid steps across TCs
            vmem_limit_bytes=int(vmem_limit_bytes),
        ),
    )(xp_flat, pe_w, pos_tile, w1, b1, ln_g, ln_b, w2p, b2p)


# --------------------------------- model ----------------------------------- #
def extract_pooled_patches(x, ph, pw):
    """NCHW image -> H_p-mean-pooled patches (B, W_p, Cin*ph*pw), Conv2d order.

    The mean over the H_p patch-grid axis is taken BEFORE the big transpose so
    the relayout touches H_p x less data.
    """
    # TODO(synk): for large H/W, fold this gather into the kernel via a 2-D
    # BlockSpec index_map over the (H_p, W_p) patch grid instead of a
    # wrapper-side XLA transpose.
    B, Cin, H, W = x.shape
    h_p, w_p = H // ph, W // pw
    p = x.reshape(B, Cin, h_p, ph, w_p, pw)
    p = p.mean(axis=2)                      # (B, Cin, ph, W_p, pw), f32 mean
    p = p.transpose(0, 3, 1, 2, 4)          # (B, W_p, Cin, ph, pw)
    return p.reshape(B, w_p, Cin * ph * pw), (h_p, w_p)


def init_params(key, *, in_chans, patch, num_features, d_embedding, nb_classes,
                n_tokens):
    ks = jax.random.split(key, 4)
    pdim = in_chans * patch[0] * patch[1]
    return {
        # encoder.patch_embed (Conv2d as a matmul) + encoder.pos_embed
        "pe_w": 0.02 * jax.random.normal(ks[0], (pdim, num_features), jnp.float32),
        "pe_b": jnp.zeros((1, num_features), jnp.float32),
        "pos": 0.02 * jax.random.normal(ks[1], (n_tokens, num_features), jnp.float32),
        # ctc_classifier
        "w1": 0.02 * jax.random.normal(ks[2], (num_features, d_embedding), jnp.float32),
        "b1": jnp.zeros((1, d_embedding), jnp.float32),
        "ln_g": jnp.ones((1, d_embedding), jnp.float32),
        "ln_b": jnp.zeros((1, d_embedding), jnp.float32),
        "w2": 0.02 * jax.random.normal(ks[3], (d_embedding, nb_classes + 1), jnp.float32),
        "b2": jnp.zeros((1, nb_classes + 1), jnp.float32),
    }


def ctc_rec_model_forward(inputs, params, *, patch):
    x, tgt, tgt_lens = inputs        # tgt / tgt_lens are unused by forward()
    del tgt, tgt_lens
    B = x.shape[0]
    C = params["pe_w"].shape[1]
    K = params["w2"].shape[1]

    # ---- algebraic pool fold: mean over H_p commutes with the linear patch
    # embed + pos add while the encoder is patch_embed + pos_embed only. ------
    # TODO(synk): create_encoder's transformer blocks are not specified in the
    # provided module; if blocks sit between embed and pool, this fold (and the
    # encoder restriction) must move back after them.
    xp, (h_p, w_p) = extract_pooled_patches(x, *patch)         # (B, W_p, Pdim) f32
    pdim = xp.shape[-1]

    # Lane padding: C, Pdim, K -> multiples of 128 (zero padding keeps the math
    # exact; padded logits columns are sliced off below).
    c_pad = _round_up(C, 128)
    pdim_pad = _round_up(pdim, 128)
    k_pad = _round_up(K, 128)

    vmem_budget = _vmem_budget_bytes()
    bt = _choose_batch_tile(B, w_p, pdim_pad, c_pad, k_pad, vmem_budget)
    b_pad = _round_up(B, bt)

    xp = xp.astype(jnp.bfloat16)
    xp = jnp.pad(xp, ((0, b_pad - B), (0, 0), (0, pdim_pad - pdim)))
    xp_flat = xp.reshape(b_pad * w_p, pdim_pad)

    pe_w = jnp.pad(params["pe_w"],
                   ((0, pdim_pad - pdim), (0, c_pad - C))).astype(jnp.bfloat16)
    w1 = jnp.pad(params["w1"], ((0, c_pad - C), (0, 0))).astype(jnp.bfloat16)
    w2p = jnp.pad(params["w2"], ((0, 0), (0, k_pad - K))).astype(jnp.bfloat16)
    b2p = jnp.pad(params["b2"], ((0, 0), (0, k_pad - K)))

    # H_p-pooled (pos_embed + conv bias), lane-padded and tiled once per batch
    # tile: (bt*W_p, C_pad) — a few KiB, vs the old (bt*N, C) tile.
    pos_pooled = params["pos"].reshape(h_p, w_p, C).mean(axis=0) + params["pe_b"]
    pos_pooled = jnp.pad(pos_pooled, ((0, 0), (0, c_pad - C)))
    pos_tile = jnp.tile(pos_pooled, (bt, 1))

    call_args = (xp_flat, pe_w, pos_tile, w1, params["b1"],
                 params["ln_g"], params["ln_b"], w2p, b2p)
    call_kwargs = dict(bt=bt, w_p=w_p, vmem_limit_bytes=vmem_budget)
    try:
        out = ctc_rec_fused_call(*call_args, single_buffer_consts=True,
                                 **call_kwargs)
    except Exception:
        # pl.Buffered(1) single-buffering of the grid-invariant weights is a
        # perf-only hint; fall back to default double-buffering if this build
        # of Pallas/Mosaic rejects it.
        out = ctc_rec_fused_call(*call_args, single_buffer_consts=False,
                                 **call_kwargs)

    out = out.reshape(b_pad, w_p, k_pad)
    return out[:B, :, :K]


# ------------------------------ pure-JAX reference -------------------------- #
def _reference_forward(x, params, *, patch):
    """Direct transcription of the PyTorch forward (f32, un-folded pool)."""
    B, Cin, H, W = x.shape
    ph, pw = patch
    h_p, w_p = H // ph, W // pw
    C = params["pe_w"].shape[1]
    p = x.reshape(B, Cin, h_p, ph, w_p, pw).transpose(0, 2, 4, 1, 3, 5)
    p = p.reshape(B, h_p * w_p, Cin * ph * pw)
    enc = jnp.einsum("bnp,pc->bnc", p, params["pe_w"],
                     precision=jax.lax.Precision.HIGHEST)
    enc = enc + params["pe_b"][None] + params["pos"][None]
    pooled = enc.reshape(B, h_p, w_p, C).mean(axis=1)
    y = jnp.einsum("bwc,cd->bwd", pooled, params["w1"],
                   precision=jax.lax.Precision.HIGHEST) + params["b1"][None]
    mu = y.mean(-1, keepdims=True)
    var = ((y - mu) ** 2).mean(-1, keepdims=True)
    y = (y - mu) / jnp.sqrt(var + 1e-6)
    y = y * params["ln_g"][None] + params["ln_b"][None]
    y = 0.5 * y * (1.0 + jax.lax.erf(y * 0.7071067811865476))
    return jnp.einsum("bwd,dk->bwk", y, params["w2"],
                      precision=jax.lax.Precision.HIGHEST) + params["b2"][None]


# ---------------------------------- main ------------------------------------ #
if __name__ == "__main__":
    key = jax.random.PRNGKey(0)
    k_x, k_p = jax.random.split(key)

    B, Cin, H, W = 4, 3, 16, 32
    patch = (8, 8)
    num_features = 32        # encoder.num_features (small synthetic size)
    d_embedding = 512        # hard-coded in the module
    nb_classes = 10
    h_p, w_p = H // patch[0], W // patch[1]
    n_tokens = h_p * w_p

    x = jax.random.normal(k_x, (B, Cin, H, W), jnp.float32)
    tgt = jnp.zeros((B, 5), jnp.int32)
    tgt_lens = jnp.full((B,), 5, jnp.int32)

    params = init_params(k_p, in_chans=Cin, patch=patch,
                         num_features=num_features, d_embedding=d_embedding,
                         nb_classes=nb_classes, n_tokens=n_tokens)

    out = ctc_rec_model_forward((x, tgt, tgt_lens), params, patch=patch)
    out = jax.block_until_ready(out)
    assert out.shape == (B, w_p, nb_classes + 1), out.shape
    assert bool(jnp.all(jnp.isfinite(out))), "non-finite logits"

    ref = _reference_forward(x, params, patch=patch)
    max_err = float(jnp.max(jnp.abs(out - ref)))
    assert max_err < 5e-2, f"mismatch vs pure-JAX reference: max_err={max_err}"

    print("KERNEL_OK")
</pallas_src>

<mosaic_0001>
module attributes {stable_mosaic.version = 11 : i64} {
  func.func @_ctc_rec_fused_kernel(%arg0: i32, %arg1: memref<8x256xbf16, #tpu.memory_space<vmem>>, %arg2: memref<256x128xbf16, #tpu.memory_space<vmem>>, %arg3: memref<8x128xf32, #tpu.memory_space<vmem>>, %arg4: memref<128x512xbf16, #tpu.memory_space<vmem>>, %arg5: memref<1x512xf32, #tpu.memory_space<vmem>>, %arg6: memref<1x512xf32, #tpu.memory_space<vmem>>, %arg7: memref<1x512xf32, #tpu.memory_space<vmem>>, %arg8: memref<512x128xbf16, #tpu.memory_space<vmem>>, %arg9: memref<1x128xf32, #tpu.memory_space<vmem>>, %arg10: memref<8x128xf32, #tpu.memory_space<vmem>>) attributes {dimension_semantics = [#tpu.dimension_semantics<parallel>], iteration_bounds = array<i64: 2>, scalar_prefetch = 0 : i64, scratch_operands = 0 : i64, tpu.core_type = #tpu.core_type<tc>, window_params = [{transform_indices = @transform_0, window_bounds = array<i64: 8, 256>}, {pipeline_mode = #tpu.pipeline_mode<synchronous>, transform_indices = @transform_1, window_bounds = array<i64: 256, 128>}, {pipeline_mode = #tpu.pipeline_mode<synchronous>, transform_indices = @transform_2, window_bounds = array<i64: 8, 128>}, {pipeline_mode = #tpu.pipeline_mode<synchronous>, transform_indices = @transform_3, window_bounds = array<i64: 128, 512>}, {pipeline_mode = #tpu.pipeline_mode<synchronous>, transform_indices = @transform_4, window_bounds = array<i64: 1, 512>}, {pipeline_mode = #tpu.pipeline_mode<synchronous>, transform_indices = @transform_5, window_bounds = array<i64: 1, 512>}, {pipeline_mode = #tpu.pipeline_mode<synchronous>, transform_indices = @transform_6, window_bounds = array<i64: 1, 512>}, {pipeline_mode = #tpu.pipeline_mode<synchronous>, transform_indices = @transform_7, window_bounds = array<i64: 512, 128>}, {pipeline_mode = #tpu.pipeline_mode<synchronous>, transform_indices = @transform_8, window_bounds = array<i64: 1, 128>}, {transform_indices = @transform_9, window_bounds = array<i64: 8, 128>}]} {
    %c0 = arith.constant 0 : index
    %c0_0 = arith.constant 0 : index
    %0 = vector.load %arg1[%c0, %c0_0] : memref<8x256xbf16, #tpu.memory_space<vmem>>, vector<8x256xbf16>
    %c0_1 = arith.constant 0 : index
    %c0_2 = arith.constant 0 : index
    %1 = vector.load %arg2[%c0_1, %c0_2] : memref<256x128xbf16, #tpu.memory_space<vmem>>, vector<256x128xbf16>
    %cst = arith.constant dense<0.000000e+00> : vector<8x128xf32>
    %2 = tpu.matmul %0, %1, %cst {dimension_numbers = #tpu.dot_dimension_numbers<[1], [0], [0], [1], [0, 0, 1, 1], [], []>} : vector<8x256xbf16>, vector<256x128xbf16>, vector<8x128xf32> -> vector<8x128xf32>
    %c0_3 = arith.constant 0 : index
    %c0_4 = arith.constant 0 : index
    %3 = vector.load %arg3[%c0_3, %c0_4] : memref<8x128xf32, #tpu.memory_space<vmem>>, vector<8x128xf32>
    %4 = arith.addf %2, %3 : vector<8x128xf32>
    %5 = arith.truncf %4 : vector<8x128xf32> to vector<8x128xbf16>
    %c0_5 = arith.constant 0 : index
    %c0_6 = arith.constant 0 : index
    %6 = vector.load %arg4[%c0_5, %c0_6] : memref<128x512xbf16, #tpu.memory_space<vmem>>, vector<128x512xbf16>
    %cst_7 = arith.constant dense<0.000000e+00> : vector<8x512xf32>
    %7 = tpu.matmul %5, %6, %cst_7 {dimension_numbers = #tpu.dot_dimension_numbers<[1], [0], [0], [1], [0, 0, 1, 1], [], []>} : vector<8x128xbf16>, vector<128x512xbf16>, vector<8x512xf32> -> vector<8x512xf32>
    %c0_8 = arith.constant 0 : index
    %c0_9 = arith.constant 0 : index
    %8 = vector.load %arg5[%c0_8, %c0_9] : memref<1x512xf32, #tpu.memory_space<vmem>>, vector<1x512xf32>
    %9 = vector.broadcast %8 : vector<1x512xf32> to vector<8x512xf32>
    %10 = arith.addf %7, %9 : vector<8x512xf32>
    %cst_10 = arith.constant dense<0.000000e+00> : vector<8xf32>
    %11 = vector.multi_reduction <add>, %10, %cst_10 [1] : vector<8x512xf32> to vector<8xf32>
    %12 = vector.shape_cast %11 : vector<8xf32> to vector<8x1xf32>
    %cst_11 = arith.constant 5.120000e+02 : f32
    %13 = vector.broadcast %cst_11 : f32 to vector<8x1xf32>
    %14 = arith.divf %12, %13 : vector<8x1xf32>
    %15 = vector.broadcast %14 : vector<8x1xf32> to vector<8x512xf32>
    %16 = arith.subf %10, %15 : vector<8x512xf32>
    %17 = arith.mulf %16, %16 : vector<8x512xf32>
    %cst_12 = arith.constant dense<0.000000e+00> : vector<8xf32>
    %18 = vector.multi_reduction <add>, %17, %cst_12 [1] : vector<8x512xf32> to vector<8xf32>
    %19 = vector.shape_cast %18 : vector<8xf32> to vector<8x1xf32>
    %cst_13 = arith.constant 5.120000e+02 : f32
    %20 = vector.broadcast %cst_13 : f32 to vector<8x1xf32>
    %21 = arith.divf %19, %20 : vector<8x1xf32>
    %22 = vector.broadcast %14 : vector<8x1xf32> to vector<8x512xf32>
    %23 = arith.subf %10, %22 : vector<8x512xf32>
    %cst_14 = arith.constant 9.99999997E-7 : f32
    %24 = vector.broadcast %cst_14 : f32 to vector<8x1xf32>
    %25 = arith.addf %21, %24 : vector<8x1xf32>
    %26 = math.rsqrt %25 : vector<8x1xf32>
    %27 = vector.broadcast %26 : vector<8x1xf32> to vector<8x512xf32>
    %28 = arith.mulf %23, %27 : vector<8x512xf32>
    %c0_15 = arith.constant 0 : index
    %c0_16 = arith.constant 0 : index
    %29 = vector.load %arg6[%c0_15, %c0_16] : memref<1x512xf32, #tpu.memory_space<vmem>>, vector<1x512xf32>
    %30 = vector.broadcast %29 : vector<1x512xf32> to vector<8x512xf32>
    %31 = arith.mulf %28, %30 : vector<8x512xf32>
    %c0_17 = arith.constant 0 : index
    %c0_18 = arith.constant 0 : index
    %32 = vector.load %arg7[%c0_17, %c0_18] : memref<1x512xf32, #tpu.memory_space<vmem>>, vector<1x512xf32>
    %33 = vector.broadcast %32 : vector<1x512xf32> to vector<8x512xf32>
    %34 = arith.addf %31, %33 : vector<8x512xf32>
    %cst_19 = arith.constant 5.000000e-01 : f32
    %35 = vector.broadcast %cst_19 : f32 to vector<8x512xf32>
    %36 = arith.mulf %35, %34 : vector<8x512xf32>
    %cst_20 = arith.constant 0.707106769 : f32
    %37 = vector.broadcast %cst_20 : f32 to vector<8x512xf32>
    %38 = arith.mulf %34, %37 : vector<8x512xf32>
    %39 = math.erf %38 : vector<8x512xf32>
    %cst_21 = arith.constant 1.000000e+00 : f32
    %40 = vector.broadcast %cst_21 : f32 to vector<8x512xf32>
    %41 = arith.addf %40, %39 : vector<8x512xf32>
    %42 = arith.mulf %36, %41 : vector<8x512xf32>
    %43 = arith.truncf %42 : vector<8x512xf32> to vector<8x512xbf16>
    %c0_22 = arith.constant 0 : index
    %c0_23 = arith.constant 0 : index
    %44 = vector.load %arg8[%c0_22, %c0_23] : memref<512x128xbf16, #tpu.memory_space<vmem>>, vector<512x128xbf16>
    %cst_24 = arith.constant dense<0.000000e+00> : vector<8x128xf32>
    %45 = tpu.matmul %43, %44, %cst_24 {dimension_numbers = #tpu.dot_dimension_numbers<[1], [0], [0], [1], [0, 0, 1, 1], [], []>} : vector<8x512xbf16>, vector<512x128xbf16>, vector<8x128xf32> -> vector<8x128xf32>
    %c0_25 = arith.constant 0 : index
    %c0_26 = arith.constant 0 : index
    %46 = vector.load %arg9[%c0_25, %c0_26] : memref<1x128xf32, #tpu.memory_space<vmem>>, vector<1x128xf32>
    %47 = vector.broadcast %46 : vector<1x128xf32> to vector<8x128xf32>
    %48 = arith.addf %45, %47 : vector<8x128xf32>
    %c0_27 = arith.constant 0 : index
    %c0_28 = arith.constant 0 : index
    %49 = vector.load %arg10[%c0_27, %c0_28] : memref<8x128xf32, #tpu.memory_space<vmem>>, vector<8x128xf32>
    tpu.vector_store %arg10[%c0_27, %c0_28], %48 {strides = array<i32>} : memref<8x128xf32, #tpu.memory_space<vmem>>, vector<8x128xf32>,
    return
  }
  func.func @transform_0(%arg0: i32) -> (i32, i32) {
    %c0_i32 = arith.constant 0 : i32
    %c0_i32_0 = arith.constant 0 : i32
    return %arg0, %c0_i32 : i32, i32
  }
  func.func @transform_1(%arg0: i32) -> (i32, i32) {
    %c0_i32 = arith.constant 0 : i32
    %c0_i32_0 = arith.constant 0 : i32
    %c0_i32_1 = arith.constant 0 : i32
    return %c0_i32, %c0_i32_0 : i32, i32
  }
  func.func @transform_2(%arg0: i32) -> (i32, i32) {
    %c0_i32 = arith.constant 0 : i32
    %c0_i32_0 = arith.constant 0 : i32
    %c0_i32_1 = arith.constant 0 : i32
    return %c0_i32, %c0_i32_0 : i32, i32
  }
  func.func @transform_3(%arg0: i32) -> (i32, i32) {
    %c0_i32 = arith.constant 0 : i32
    %c0_i32_0 = arith.constant 0 : i32
    %c0_i32_1 = arith.constant 0 : i32
    return %c0_i32, %c0_i32_0 : i32, i32
  }
  func.func @transform_4(%arg0: i32) -> (i32, i32) {
    %c0_i32 = arith.constant 0 : i32
    %c0_i32_0 = arith.constant 0 : i32
    %c0_i32_1 = arith.constant 0 : i32
    return %c0_i32, %c0_i32_0 : i32, i32
  }
  func.func @transform_5(%arg0: i32) -> (i32, i32) {
    %c0_i32 = arith.constant 0 : i32
    %c0_i32_0 = arith.constant 0 : i32
    %c0_i32_1 = arith.constant 0 : i32
    return %c0_i32, %c0_i32_0 : i32, i32
  }
  func.func @transform_6(%arg0: i32) -> (i32, i32) {
    %c0_i32 = arith.constant 0 : i32
    %c0_i32_0 = arith.constant 0 : i32
    %c0_i32_1 = arith.constant 0 : i32
    return %c0_i32, %c0_i32_0 : i32, i32
  }
  func.func @transform_7(%arg0: i32) -> (i32, i32) {
    %c0_i32 = arith.constant 0 : i32
    %c0_i32_0 = arith.constant 0 : i32
    %c0_i32_1 = arith.constant 0 : i32
    return %c0_i32, %c0_i32_0 : i32, i32
  }
  func.func @transform_8(%arg0: i32) -> (i32, i32) {
    %c0_i32 = arith.constant 0 : i32
    %c0_i32_0 = arith.constant 0 : i32
    %c0_i32_1 = arith.constant 0 : i32
    return %c0_i32, %c0_i32_0 : i32, i32
  }
  func.func @transform_9(%arg0: i32) -> (i32, i32) {
    %c0_i32 = arith.constant 0 : i32
    %c0_i32_0 = arith.constant 0 : i32
    return %arg0, %c0_i32 : i32, i32
  }
}

module attributes {stable_mosaic.version = 11 : i64} {
  func.func @_ctc_rec_fused_kernel(%arg0: i32, %arg1: memref<8x256xbf16, #tpu.memory_space<vmem>>, %arg2: memref<256x128xbf16, #tpu.memory_space<vmem>>, %arg3: memref<8x128xf32, #tpu.memory_space<vmem>>, %arg4: memref<128x512xbf16, #tpu.memory_space<vmem>>, %arg5: memref<1x512xf32, #tpu.memory_space<vmem>>, %arg6: memref<1x512xf32, #tpu.memory_space<vmem>>, %arg7: memref<1x512xf32, #tpu.memory_space<vmem>>, %arg8: memref<512x128xbf16, #tpu.memory_space<vmem>>, %arg9: memref<1x128xf32, #tpu.memory_space<vmem>>, %arg10: memref<8x128xf32, #tpu.memory_space<vmem>>) attributes {dimension_semantics = [#tpu.dimension_semantics<parallel>], iteration_bounds = array<i64: 2>, scalar_prefetch = 0 : i64, scratch_operands = 0 : i64, tpu.core_type = #tpu.core_type<tc>, window_params = [{transform_indices = @transform_0, window_bounds = array<i64: 8, 256>}, {pipeline_mode = #tpu.pipeline_mode<synchronous>, transform_indices = @transform_1, window_bounds = array<i64: 256, 128>}, {pipeline_mode = #tpu.pipeline_mode<synchronous>, transform_indices = @transform_2, window_bounds = array<i64: 8, 128>}, {pipeline_mode = #tpu.pipeline_mode<synchronous>, transform_indices = @transform_3, window_bounds = array<i64: 128, 512>}, {pipeline_mode = #tpu.pipeline_mode<synchronous>, transform_indices = @transform_4, window_bounds = array<i64: 1, 512>}, {pipeline_mode = #tpu.pipeline_mode<synchronous>, transform_indices = @transform_5, window_bounds = array<i64: 1, 512>}, {pipeline_mode = #tpu.pipeline_mode<synchronous>, transform_indices = @transform_6, window_bounds = array<i64: 1, 512>}, {pipeline_mode = #tpu.pipeline_mode<synchronous>, transform_indices = @transform_7, window_bounds = array<i64: 512, 128>}, {pipeline_mode = #tpu.pipeline_mode<synchronous>, transform_indices = @transform_8, window_bounds = array<i64: 1, 128>}, {transform_indices = @transform_9, window_bounds = array<i64: 8, 128>}]} {
    %c0 = arith.constant 0 : index
    %c0_0 = arith.constant 0 : index
    %0 = vector.load %arg1[%c0, %c0_0] : memref<8x256xbf16, #tpu.memory_space<vmem>>, vector<8x256xbf16>
    %c0_1 = arith.constant 0 : index
    %c0_2 = arith.constant 0 : index
    %1 = vector.load %arg2[%c0_1, %c0_2] : memref<256x128xbf16, #tpu.memory_space<vmem>>, vector<256x128xbf16>
    %cst = arith.constant dense<0.000000e+00> : vector<8x128xf32>
    %2 = tpu.matmul %0, %1, %cst {dimension_numbers = #tpu.dot_dimension_numbers<[1], [0], [0], [1], [0, 0, 1, 1], [], []>} : vector<8x256xbf16>, vector<256x128xbf16>, vector<8x128xf32> -> vector<8x128xf32>
    %c0_3 = arith.constant 0 : index
    %c0_4 = arith.constant 0 : index
    %3 = vector.load %arg3[%c0_3, %c0_4] : memref<8x128xf32, #tpu.memory_space<vmem>>, vector<8x128xf32>
    %4 = arith.addf %2, %3 : vector<8x128xf32>
    %5 = arith.truncf %4 : vector<8x128xf32> to vector<8x128xbf16>
    %c0_5 = arith.constant 0 : index
    %c0_6 = arith.constant 0 : index
    %6 = vector.load %arg4[%c0_5, %c0_6] : memref<128x512xbf16, #tpu.memory_space<vmem>>, vector<128x512xbf16>
    %cst_7 = arith.constant dense<0.000000e+00> : vector<8x512xf32>
    %7 = tpu.matmul %5, %6, %cst_7 {dimension_numbers = #tpu.dot_dimension_numbers<[1], [0], [0], [1], [0, 0, 1, 1], [], []>} : vector<8x128xbf16>, vector<128x512xbf16>, vector<8x512xf32> -> vector<8x512xf32>
    %c0_8 = arith.constant 0 : index
    %c0_9 = arith.constant 0 : index
    %8 = vector.load %arg5[%c0_8, %c0_9] : memref<1x512xf32, #tpu.memory_space<vmem>>, vector<1x512xf32>
    %9 = vector.broadcast %8 : vector<1x512xf32> to vector<8x512xf32>
    %10 = arith.addf %7, %9 : vector<8x512xf32>
    %cst_10 = arith.constant dense<0.000000e+00> : vector<8xf32>
    %11 = vector.multi_reduction <add>, %10, %cst_10 [1] : vector<8x512xf32> to vector<8xf32>
    %12 = vector.shape_cast %11 : vector<8xf32> to vector<8x1xf32>
    %cst_11 = arith.constant 5.120000e+02 : f32
    %13 = vector.broadcast %cst_11 : f32 to vector<8x1xf32>
    %14 = arith.divf %12, %13 : vector<8x1xf32>
    %15 = vector.broadcast %14 : vector<8x1xf32> to vector<8x512xf32>
    %16 = arith.subf %10, %15 : vector<8x512xf32>
    %17 = arith.mulf %16, %16 : vector<8x512xf32>
    %cst_12 = arith.constant dense<0.000000e+00> : vector<8xf32>
    %18 = vector.multi_reduction <add>, %17, %cst_12 [1] : vector<8x512xf32> to vector<8xf32>
    %19 = vector.shape_cast %18 : vector<8xf32> to vector<8x1xf32>
    %cst_13 = arith.constant 5.120000e+02 : f32
    %20 = vector.broadcast %cst_13 : f32 to vector<8x1xf32>
    %21 = arith.divf %19, %20 : vector<8x1xf32>
    %22 = vector.broadcast %14 : vector<8x1xf32> to vector<8x512xf32>
    %23 = arith.subf %10, %22 : vector<8x512xf32>
    %cst_14 = arith.constant 9.99999997E-7 : f32
    %24 = vector.broadcast %cst_14 : f32 to vector<8x1xf32>
    %25 = arith.addf %21, %24 : vector<8x1xf32>
    %26 = math.rsqrt %25 : vector<8x1xf32>
    %27 = vector.broadcast %26 : vector<8x1xf32> to vector<8x512xf32>
    %28 = arith.mulf %23, %27 : vector<8x512xf32>
    %c0_15 = arith.constant 0 : index
    %c0_16 = arith.constant 0 : index
    %29 = vector.load %arg6[%c0_15, %c0_16] : memref<1x512xf32, #tpu.memory_space<vmem>>, vector<1x512xf32>
    %30 = vector.broadcast %29 : vector<1x512xf32> to vector<8x512xf32>
    %31 = arith.mulf %28, %30 : vector<8x512xf32>
    %c0_17 = arith.constant 0 : index
    %c0_18 = arith.constant 0 : index
    %32 = vector.load %arg7[%c0_17, %c0_18] : memref<1x512xf32, #tpu.memory_space<vmem>>, vector<1x512xf32>
    %33 = vector.broadcast %32 : vector<1x512xf32> to vector<8x512xf32>
    %34 = arith.addf %31, %33 : vector<8x512xf32>
    %cst_19 = arith.constant 5.000000e-01 : f32
    %35 = vector.broadcast %cst_19 : f32 to vector<8x512xf32>
    %36 = arith.mulf %35, %34 : vector<8x512xf32>
    %cst_20 = arith.constant 0.707106769 : f32
    %37 = vector.broadcast %cst_20 : f32 to vector<8x512xf32>
    %38 = arith.mulf %34, %37 : vector<8x512xf32>
    %39 = math.erf %38 : vector<8x512xf32>
    %cst_21 = arith.constant 1.000000e+00 : f32
    %40 = vector.broadcast %cst_21 : f32 to vector<8x512xf32>
    %41 = arith.addf %40, %39 : vector<8x512xf32>
    %42 = arith.mulf %36, %41 : vector<8x512xf32>
    %43 = arith.truncf %42 : vector<8x512xf32> to vector<8x512xbf16>
    %c0_22 = arith.constant 0 : index
    %c0_23 = arith.constant 0 : index
    %44 = vector.load %arg8[%c0_22, %c0_23] : memref<512x128xbf16, #tpu.memory_space<vmem>>, vector<512x128xbf16>
    %cst_24 = arith.constant dense<0.000000e+00> : vector<8x128xf32>
    %45 = tpu.matmul %43, %44, %cst_24 {dimension_numbers = #tpu.dot_dimension_numbers<[1], [0], [0], [1], [0, 0, 1, 1], [], []>} : vector<8x512xbf16>, vector<512x128xbf16>, vector<8x128xf32> -> vector<8x128xf32>
    %c0_25 = arith.constant 0 : index
    %c0_26 = arith.constant 0 : index
    %46 = vector.load %arg9[%c0_25, %c0_26] : memref<1x128xf32, #tpu.memory_space<vmem>>, vector<1x128xf32>
    %47 = vector.broadcast %46 : vector<1x128xf32> to vector<8x128xf32>
    %48 = arith.addf %45, %47 : vector<8x128xf32>
    %c0_27 = arith.constant 0 : index
    %c0_28 = arith.constant 0 : index
    %49 = vector.load %arg10[%c0_27, %c0_28] : memref<8x128xf32, #tpu.memory_space<vmem>>, vector<8x128xf32>
    tpu.vector_store %arg10[%c0_27, %c0_28], %48 {strides = array<i32>} : memref<8x128xf32, #tpu.memory_space<vmem>>, vector<8x128xf32>,
    return
  }
  func.func @transform_0(%arg0: i32) -> (i32, i32) {
    %c0_i32 = arith.constant 0 : i32
    %c0_i32_0 = arith.constant 0 : i32
    return %arg0, %c0_i32 : i32, i32
  }
  func.func @transform_1(%arg0: i32) -> (i32, i32) {
    %c0_i32 = arith.constant 0 : i32
    %c0_i32_0 = arith.constant 0 : i32
    %c0_i32_1 = arith.constant 0 : i32
    return %c0_i32, %c0_i32_0 : i32, i32
  }
  func.func @transform_2(%arg0: i32) -> (i32, i32) {
    %c0_i32 = arith.constant 0 : i32
    %c0_i32_0 = arith.constant 0 : i32
    %c0_i32_1 = arith.constant 0 : i32
    return %c0_i32, %c0_i32_0 : i32, i32
  }
  func.func @transform_3(%arg0: i32) -> (i32, i32) {
    %c0_i32 = arith.constant 0 : i32
    %c0_i32_0 = arith.constant 0 : i32
    %c0_i32_1 = arith.constant 0 : i32
    return %c0_i32, %c0_i32_0 : i32, i32
  }
  func.func @transform_4(%arg0: i32) -> (i32, i32) {
    %c0_i32 = arith.constant 0 : i32
    %c0_i32_0 = arith.constant 0 : i32
    %c0_i32_1 = arith.constant 0 : i32
    return %c0_i32, %c0_i32_0 : i32, i32
  }
  func.func @transform_5(%arg0: i32) -> (i32, i32) {
    %c0_i32 = arith.constant 0 : i32
    %c0_i32_0 = arith.constant 0 : i32
    %c0_i32_1 = arith.constant 0 : i32
    return %c0_i32, %c0_i32_0 : i32, i32
  }
  func.func @transform_6(%arg0: i32) -> (i32, i32) {
    %c0_i32 = arith.constant 0 : i32
    %c0_i32_0 = arith.constant 0 : i32
    %c0_i32_1 = arith.constant 0 : i32
    return %c0_i32, %c0_i32_0 : i32, i32
  }
  func.func @transform_7(%arg0: i32) -> (i32, i32) {
    %c0_i32 = arith.constant 0 : i32
    %c0_i32_0 = arith.constant 0 : i32
    %c0_i32_1 = arith.constant 0 : i32
    return %c0_i32, %c0_i32_0 : i32, i32
  }
  func.func @transform_8(%arg0: i32) -> (i32, i32) {
    %c0_i32 = arith.constant 0 : i32
    %c0_i32_0 = arith.constant 0 : i32
    %c0_i32_1 = arith.constant 0 : i32
    return %c0_i32, %c0_i32_0 : i32, i32
  }
  func.func @transform_9(%arg0: i32) -> (i32, i32) {
    %c0_i32 = arith.constant 0 : i32
    %c0_i32_0 = arith.constant 0 : i32
    return %arg0, %c0_i32 : i32, i32
  }
}

</mosaic_0001>

<llo_original>
// kernel: tpu_custom_call.1
$region0: #{tpu_custom_call.1}
  #allocation0 [shape = 'u32[]', space=smem, size = 0x4, offset = 0x4, fixed_abs, tag = 'smem constant byte address 0x4 - core index']
  #allocation1 [shape = 'u32[144,128]{1,0:T(1,128)}', space=vmem, size = 0x12000, scoped, tag = 'internal scratch']
  %s0 = inlined_call_operand.hbm [shape: bf16[16,256], index: 0, kind: input, shape index: {}]
  %s1 = inlined_call_operand.hbm [shape: bf16[256,128], index: 1, kind: input, shape index: {}]
  %s2 = inlined_call_operand.hbm [shape: f32[8,128], index: 2, kind: input, shape index: {}]
  %s3 = inlined_call_operand.hbm [shape: bf16[128,512], index: 3, kind: input, shape index: {}]
  %s4 = inlined_call_operand.vmem [shape: f32[1,512], index: 4, kind: input, shape index: {}]
  %s5 = inlined_call_operand.vmem [shape: f32[1,512], index: 5, kind: input, shape index: {}]
  %s6 = inlined_call_operand.hbm [shape: f32[1,512], index: 6, kind: input, shape index: {}]
  %s7 = inlined_call_operand.hbm [shape: bf16[512,128], index: 7, kind: input, shape index: {}]
  %s8 = inlined_call_operand.vmem [shape: f32[1,128], index: 8, kind: input, shape index: {}]
  %s9 = inlined_call_operand.hbm [shape: f32[16,128], index: 9, kind: output, shape index: {}]
  %s10 = sld [smem:[#allocation0]]
  $region93: #{tpu_custom_call.1} parent=0
    _
  %s12 = ssub.s32 1, %s10
  %s13 = scalar_select 0, %s12, %s10
  $region1: #{tpu_custom_call.1} parent=0
    #allocation2 [shape = 'u8[8192]{0}', space=vmem, size = 0x2000, scoped, tag = 'input window, operand 0']
    #allocation3 [shape = 's32[2]{0}', space=sflag, size = 0x8, scoped, tag = 'scoped memory for tpu_custom_call.1']
    #allocation4 [shape = 's32[2]{0}', space=sflag, size = 0x8, scoped, tag = 'scoped memory for tpu_custom_call.1']
    #allocation5 [shape = 'u8[65536]{0}', space=vmem, size = 0x10000, scoped, tag = 'input window, operand 1, single buffered']
    #allocation6 [shape = 's32[1]{0}', space=sflag, size = 0x4, scoped, tag = 'scoped memory for tpu_custom_call.1']
    #allocation7 [shape = 'u8[4096]{0}', space=vmem, size = 0x1000, scoped, tag = 'input window, operand 2, single buffered']
    #allocation8 [shape = 'u8[131072]{0}', space=vmem, size = 0x20000, scoped, tag = 'input window, operand 3, single buffered']
    #allocation9 [shape = 's32[1]{0}', space=sflag, size = 0x4, scoped, tag = 'scoped memory for tpu_custom_call.1']
    #allocation10 [shape = 'u8[2048]{0}', space=vmem, size = 0x800, scoped, tag = 'input window, operand 6, single buffered']
    #allocation11 [shape = 'u8[131072]{0}', space=vmem, size = 0x20000, scoped, tag = 'input window, operand 7, single buffered']
    #allocation12 [shape = 's32[1]{0}', space=sflag, size = 0x4, scoped, tag = 'scoped memory for tpu_custom_call.1']
    #allocation13 [shape = 'u8[8192]{0}', space=vmem, size = 0x2000, scoped, tag = 'output window, operand 0']
    %14 = vsyncpa [#allocation3], 0
    %s15 = scalar_lea.sflag [#allocation3], 1
    %16 = vsyncpa %s15, 0
    %17 = vsyncpa [#allocation6], 0
    %18 = vsyncpa [#allocation9], 0
    %19 = vsyncpa [#allocation12], 0
    %20 = vsyncpa [#allocation4], 0
    %s21 = scalar_lea.sflag [#allocation4], 1
    %22 = vsyncpa %s21, 0
    loop: start=0, step=1, limit=4
    $region2: #{tpu_custom_call.1} parent=1 // loop_pre_header
      _
    $region3: #{tpu_custom_call.1} parent=1 // loop_header
      %s24 = sphi 0, %s28
      %p25 = scmp.ge.s32.totalorder %s24, 4
      %s34 = sphi 0, %s36
      %s37 = sphi 0, %s34
      %s38 = sphi 0, %s37
      %s54 = sphi 0, %s38
      %s58 = sphi 0, %s58
      %s60 = sphi 0, %s58
      %s61 = sphi 0, %s60
      %s75 = sphi 0, %s61
      %s79 = sphi 0, %s79
      %s81 = sphi 0, %s79
      %s82 = sphi 0, %s81
      %s96 = sphi 0, %s82
      %s100 = sphi 0, %s100
      %s102 = sphi 0, %s100
      %s103 = sphi 0, %s102
      %s117 = sphi 0, %s103
      %s121 = sphi 0, %s121
      %s123 = sphi 0, %s121
      %s124 = sphi 0, %s123
      %s138 = sphi 0, %s124
      %s142 = sphi 0, %s142
      %s144 = sphi 0, %s142
      %s145 = sphi 0, %s144
      %s159 = sphi 0, %s145
      %s163 = sphi 0, %s163
      %s165 = sphi 0, %s163
      %s166 = sphi 0, %s165
      %s180 = sphi 0, %s166
      %s184 = sphi 0, %s184
      %s186 = sphi 0, %s184
      %s187 = sphi 0, %s186
      %s201 = sphi 0, %s187
      %s205 = sphi 0, %s205
      %s207 = sphi 0, %s205
      %s208 = sphi 0, %s207
      %s222 = sphi 0, %s208
      %s228 = sphi 0, %s230
      %s231 = sphi 0, %s228
      %s232 = sphi 0, %s231
      %s248 = sphi 0, %s232
    $region4: #{tpu_custom_call.1} parent=1 // loop_header_branch
      %27 = sbr.rel (%p25) target = $region8
    $region5: #{tpu_custom_call.1} parent=1 // loop_body
      %s29 = ssub.s32 %s24, 1
      %s30 = ssub.s32 %s24, 2
      %s31 = sadd.s32 %s24, 1
      %s32 = ssub.s32 %s24, %s31
      %p33 = scmp.eq.s32.totalorder %s32, 0
      %s35 = sadd.s32 %s34, 1
      %s36 = scalar_select %p33, %s34, %s35
      %p39 = pneg %p33
      %p40 = scmp.eq.s32.totalorder %s24, 1
      %p41 = por %p39, %p40
      %p42 = scmp.ne.s32.totalorder %s34, %s37
      %p43 = scmp.eq.s32.totalorder %s24, 0
      %p44 = por %p42, %p43
      %p45 = scmp.ne.s32.totalorder %s34, %s37
      %p46 = scmp.eq.s32.totalorder %s29, 1
      %p47 = por %p45, %p46
      %p48 = scmp.ne.s32.totalorder %s37, %s38
      %p49 = scmp.eq.s32.totalorder %s29, 0
      %p50 = por %p48, %p49
      %p51 = scmp.ne.s32.totalorder %s37, %s38
      %p52 = scmp.eq.s32.totalorder %s30, 1
      %p53 = por %p51, %p52
      %p55 = scmp.ne.s32.totalorder %s38, %s54
      %p56 = scmp.eq.s32.totalorder %s30, 0
      %p57 = por %p55, %p56
      %s59 = sadd.s32 %s58, 1
      %p62 = scmp.eq.s32.totalorder %s24, 1
      %p63 = scmp.ne.s32.totalorder %s58, %s60
      %p64 = scmp.eq.s32.totalorder %s24, 0
      %p65 = por %p63, %p64
      %p66 = scmp.ne.s32.totalorder %s58, %s60
      %p67 = scmp.eq.s32.totalorder %s29, 1
      %p68 = por %p66, %p67
      %p69 = scmp.ne.s32.totalorder %s60, %s61
      %p70 = scmp.eq.s32.totalorder %s29, 0
      %p71 = por %p69, %p70
      %p72 = scmp.ne.s32.totalorder %s60, %s61
      %p73 = scmp.eq.s32.totalorder %s30, 1
      %p74 = por %p72, %p73
      %p76 = scmp.ne.s32.totalorder %s61, %s75
      %p77 = scmp.eq.s32.totalorder %s30, 0
      %p78 = por %p76, %p77
      %s80 = sadd.s32 %s79, 1
      %p83 = scmp.eq.s32.totalorder %s24, 1
      %p84 = scmp.ne.s32.totalorder %s79, %s81
      %p85 = scmp.eq.s32.totalorder %s24, 0
      %p86 = por %p84, %p85
      %p87 = scmp.ne.s32.totalorder %s79, %s81
      %p88 = scmp.eq.s32.totalorder %s29, 1
      %p89 = por %p87, %p88
      %p90 = scmp.ne.s32.totalorder %s81, %s82
      %p91 = scmp.eq.s32.totalorder %s29, 0
      %p92 = por %p90, %p91
      %p93 = scmp.ne.s32.totalorder %s81, %s82
      %p94 = scmp.eq.s32.totalorder %s30, 1
      %p95 = por %p93, %p94
      %p97 = scmp.ne.s32.totalorder %s82, %s96
      %p98 = scmp.eq.s32.totalorder %s30, 0
      %p99 = por %p97, %p98
      %s101 = sadd.s32 %s100, 1
      %p104 = scmp.eq.s32.totalorder %s24, 1
      %p105 = scmp.ne.s32.totalorder %s100, %s102
      %p106 = scmp.eq.s32.totalorder %s24, 0
      %p107 = por %p105, %p106
      %p108 = scmp.ne.s32.totalorder %s100, %s102
      %p109 = scmp.eq.s32.totalorder %s29, 1
      %p110 = por %p108, %p109
      %p111 = scmp.ne.s32.totalorder %s102, %s103
      %p112 = scmp.eq.s32.totalorder %s29, 0
      %p113 = por %p111, %p112
      %p114 = scmp.ne.s32.totalorder %s102, %s103
      %p115 = scmp.eq.s32.totalorder %s30, 1
      %p116 = por %p114, %p115
      %p118 = scmp.ne.s32.totalorder %s103, %s117
      %p119 = scmp.eq.s32.totalorder %s30, 0
      %p120 = por %p118, %p119
      %s122 = sadd.s32 %s121, 1
      %p125 = scmp.eq.s32.totalorder %s24, 1
      %p126 = scmp.ne.s32.totalorder %s121, %s123
      %p127 = scmp.eq.s32.totalorder %s24, 0
      %p128 = por %p126, %p127
      %p129 = scmp.ne.s32.totalorder %s121, %s123
      %p130 = scmp.eq.s32.totalorder %s29, 1
      %p131 = por %p129, %p130
      %p132 = scmp.ne.s32.totalorder %s123, %s124
      %p133 = scmp.eq.s32.totalorder %s29, 0
      %p134 = por %p132, %p133
      %p135 = scmp.ne.s32.totalorder %s123, %s124
      %p136 = scmp.eq.s32.totalorder %s30, 1
      %p137 = por %p135, %p136
      %p139 = scmp.ne.s32.totalorder %s124, %s138
      %p140 = scmp.eq.s32.totalorder %s30, 0
      %p141 = por %p139, %p140
      %s143 = sadd.s32 %s142, 1
      %p146 = scmp.eq.s32.totalorder %s24, 1
      %p147 = scmp.ne.s32.totalorder %s142, %s144
      %p148 = scmp.eq.s32.totalorder %s24, 0
      %p149 = por %p147, %p148
      %p150 = scmp.ne.s32.totalorder %s142, %s144
      %p151 = scmp.eq.s32.totalorder %s29, 1
      %p152 = por %p150, %p151
      %p153 = scmp.ne.s32.totalorder %s144, %s145
      %p154 = scmp.eq.s32.totalorder %s29, 0
      %p155 = por %p153, %p154
      %p156 = scmp.ne.s32.totalorder %s144, %s145
      %p157 = scmp.eq.s32.totalorder %s30, 1
      %p158 = por %p156, %p157
      %p160 = scmp.ne.s32.totalorder %s145, %s159
      %p161 = scmp.eq.s32.totalorder %s30, 0
      %p162 = por %p160, %p161
      %s164 = sadd.s32 %s163, 1
      %p167 = scmp.eq.s32.totalorder %s24, 1
      %p168 = scmp.ne.s32.totalorder %s163, %s165
      %p169 = scmp.eq.s32.totalorder %s24, 0
      %p170 = por %p168, %p169
      %p171 = scmp.ne.s32.totalorder %s163, %s165
      %p172 = scmp.eq.s32.totalorder %s29, 1
      %p173 = por %p171, %p172
      %p174 = scmp.ne.s32.totalorder %s165, %s166
      %p175 = scmp.eq.s32.totalorder %s29, 0
      %p176 = por %p174, %p175
      %p177 = scmp.ne.s32.totalorder %s165, %s166
      %p178 = scmp.eq.s32.totalorder %s30, 1
      %p179 = por %p177, %p178
      %p181 = scmp.ne.s32.totalorder %s166, %s180
      %p182 = scmp.eq.s32.totalorder %s30, 0
      %p183 = por %p181, %p182
      %s185 = sadd.s32 %s184, 1
      %p188 = scmp.eq.s32.totalorder %s24, 1
      %p189 = scmp.ne.s32.totalorder %s184, %s186
      %p190 = scmp.eq.s32.totalorder %s24, 0
      %p191 = por %p189, %p190
      %p192 = scmp.ne.s32.totalorder %s184, %s186
      %p193 = scmp.eq.s32.totalorder %s29, 1
      %p194 = por %p192, %p193
      %p195 = scmp.ne.s32.totalorder %s186, %s187
      %p196 = scmp.eq.s32.totalorder %s29, 0
      %p197 = por %p195, %p196
      %p198 = scmp.ne.s32.totalorder %s186, %s187
      %p199 = scmp.eq.s32.totalorder %s30, 1
      %p200 = por %p198, %p199
      %p202 = scmp.ne.s32.totalorder %s187, %s201
      %p203 = scmp.eq.s32.totalorder %s30, 0
      %p204 = por %p202, %p203
      %s206 = sadd.s32 %s205, 1
      %p209 = scmp.eq.s32.totalorder %s24, 1
      %p210 = scmp.ne.s32.totalorder %s205, %s207
      %p211 = scmp.eq.s32.totalorder %s24, 0
      %p212 = por %p210, %p211
      %p213 = scmp.ne.s32.totalorder %s205, %s207
      %p214 = scmp.eq.s32.totalorder %s29, 1
      %p215 = por %p213, %p214
      %p216 = scmp.ne.s32.totalorder %s207, %s208
      %p217 = scmp.eq.s32.totalorder %s29, 0
      %p218 = por %p216, %p217
      %p219 = scmp.ne.s32.totalorder %s207, %s208
      %p220 = scmp.eq.s32.totalorder %s30, 1
      %p221 = por %p219, %p220
      %p223 = scmp.ne.s32.totalorder %s208, %s222
      %p224 = scmp.eq.s32.totalorder %s30, 0
      %p225 = por %p223, %p224
      %s226 = ssub.s32 %s24, %s31
      %p227 = scmp.eq.s32.totalorder %s226, 0
      %s229 = sadd.s32 %s228, 1
      %s230 = scalar_select %p227, %s228, %s229
      %p233 = pneg %p227
      %p234 = scmp.eq.s32.totalorder %s24, 1
      %p235 = por %p233, %p234
      %p236 = scmp.ne.s32.totalorder %s228, %s231
      %p237 = scmp.eq.s32.totalorder %s24, 0
      %p238 = por %p236, %p237
      %p239 = scmp.ne.s32.totalorder %s228, %s231
      %p240 = scmp.eq.s32.totalorder %s29, 1
      %p241 = por %p239, %p240
      %p242 = scmp.ne.s32.totalorder %s231, %s232
      %p243 = scmp.eq.s32.totalorder %s29, 0
      %p244 = por %p242, %p243
      %p245 = scmp.ne.s32.totalorder %s231, %s232
      %p246 = scmp.eq.s32.totalorder %s30, 1
      %p247 = por %p245, %p246
      %p249 = scmp.ne.s32.totalorder %s232, %s248
      %p250 = scmp.eq.s32.totalorder %s30, 0
      %p251 = por %p249, %p250
      %p252 = scmp.le.s32.totalorder 1, %s24
      %p253 = scmp.lt.s32.totalorder %s24, 3
      %p254 = pnand %p252, %p253
      %p255 = pneg %p254
      // Predicated region
      $region9: #{tpu_custom_call.1} parent=5 // pred_check
        _
      $region10: #{tpu_custom_call.1} parent=5 // pred_check_branch
        %257 = sbr.rel (%p254) target = $region12
      $region11: #{tpu_custom_call.1} parent=5 // pred_region
        %s258 = ssub.s32 %s24, 1
        // Predicated region
        $region13: #{tpu_custom_call.1} parent=11 // pred_check
          %p259 = pneg %p71
        $region14: #{tpu_custom_call.1} parent=11 // pred_check_branch
          %261 = sbr.rel (%p259) target = $region16
        $region15: #{tpu_custom_call.1} parent=11 // pred_region
          %s263 = ssub.s32 2048, 2048
          %264 = vsyncadd [#allocation6], %s263
          %s265 = sshll.u32 [#allocation5], 4
          %s266 = int_to_ptr.vmem [resolvable:$true] %s265
          %271 = dma.hbm_to_vmem [thread:$0]  %s1, 2048, %s266, [#allocation6], 64, 64, 4
        $region16: #{tpu_custom_call.1} parent=11 // pred_fallthru
          _
        // Predicated region
        $region17: #{tpu_custom_call.1} parent=11 // pred_check
          %p272 = pneg %p92
        $region18: #{tpu_custom_call.1} parent=11 // pred_check_branch
          %274 = sbr.rel (%p272) target = $region20
        $region19: #{tpu_custom_call.1} parent=11 // pred_region
          %s276 = ssub.s32 128, 128
          %277 = vsyncadd [#allocation6], %s276
          %s279 = sshll.u32 [#allocation7], 4
          %s280 = int_to_ptr.vmem [resolvable:$true] %s279
          %282 = dma.hbm_to_vmem [thread:$0]  %s2, 128, %s280, [#allocation6]
        $region20: #{tpu_custom_call.1} parent=11 // pred_fallthru
          _
        // Predicated region
        $region21: #{tpu_custom_call.1} parent=11 // pred_check
          %p283 = pneg %p113
        $region22: #{tpu_custom_call.1} parent=11 // pred_check_branch
          %285 = sbr.rel (%p283) target = $region24
        $region23: #{tpu_custom_call.1} parent=11 // pred_region
          %s287 = ssub.s32 4096, 4096
          %288 = vsyncadd [#allocation9], %s287
          %s289 = sshll.u32 [#allocation8], 4
          %s290 = int_to_ptr.vmem [resolvable:$true] %s289
          %295 = dma.hbm_to_vmem [thread:$0]  %s3, 4096, %s290, [#allocation9], 256, 256, 16
        $region24: #{tpu_custom_call.1} parent=11 // pred_fallthru
          _
        // Predicated region
        $region25: #{tpu_custom_call.1} parent=11 // pred_check
          %p296 = pneg %p134
        $region26: #{tpu_custom_call.1} parent=11 // pred_check_branch
          %298 = sbr.rel (%p296) target = $region28
        $region27: #{tpu_custom_call.1} parent=11 // pred_region
          _
        $region28: #{tpu_custom_call.1} parent=11 // pred_fallthru
          _
        // Predicated region
        $region29: #{tpu_custom_call.1} parent=11 // pred_check
          %p299 = pneg %p155
        $region30: #{tpu_custom_call.1} parent=11 // pred_check_branch
          %301 = sbr.rel (%p299) target = $region32
        $region31: #{tpu_custom_call.1} parent=11 // pred_region
          _
        $region32: #{tpu_custom_call.1} parent=11 // pred_fallthru
          _
        // Predicated region
        $region33: #{tpu_custom_call.1} parent=11 // pred_check
          %p302 = pneg %p176
        $region34: #{tpu_custom_call.1} parent=11 // pred_check_branch
          %304 = sbr.rel (%p302) target = $region36
        $region35: #{tpu_custom_call.1} parent=11 // pred_region
          %s306 = ssub.s32 64, 64
          %307 = vsyncadd [#allocation9], %s306
          %s309 = sshll.u32 [#allocation10], 4
          %s310 = int_to_ptr.vmem [resolvable:$true] %s309
          %312 = dma.hbm_to_vmem [thread:$0]  %s6, 64, %s310, [#allocation9]
        $region36: #{tpu_custom_call.1} parent=11 // pred_fallthru
          _
        // Predicated region
        $region37: #{tpu_custom_call.1} parent=11 // pred_check
          %p313 = pneg %p197
        $region38: #{tpu_custom_call.1} parent=11 // pred_check_branch
          %315 = sbr.rel (%p313) target = $region40
        $region39: #{tpu_custom_call.1} parent=11 // pred_region
          %s317 = ssub.s32 4096, 4096
          %318 = vsyncadd [#allocation12], %s317
          %s319 = sshll.u32 [#allocation11], 4
          %s320 = int_to_ptr.vmem [resolvable:$true] %s319
          %325 = dma.hbm_to_vmem [thread:$0]  %s7, 4096, %s320, [#allocation12], 64, 64, 4
        $region40: #{tpu_custom_call.1} parent=11 // pred_fallthru
          _
        // Predicated region
        $region41: #{tpu_custom_call.1} parent=11 // pred_check
          %p326 = pneg %p218
        $region42: #{tpu_custom_call.1} parent=11 // pred_check_branch
          %328 = sbr.rel (%p326) target = $region44
        $region43: #{tpu_custom_call.1} parent=11 // pred_region
          _
        $region44: #{tpu_custom_call.1} parent=11 // pred_fallthru
          _
      $region12: #{tpu_custom_call.1} parent=5 // pred_fallthru
        _
      %p329 = scmp.lt.s32.totalorder %s24, 2
      // Predicated region
      $region45: #{tpu_custom_call.1} parent=5 // pred_check
        %p330 = pneg %p329
      $region46: #{tpu_custom_call.1} parent=5 // pred_check_branch
        %332 = sbr.rel (%p330) target = $region48
      $region47: #{tpu_custom_call.1} parent=5 // pred_region
        // Predicated region
        $region49: #{tpu_custom_call.1} parent=47 // pred_check
          %p333 = pneg %p44
        $region50: #{tpu_custom_call.1} parent=47 // pred_check_branch
          %335 = sbr.rel (%p333) target = $region52
        $region51: #{tpu_custom_call.1} parent=47 // pred_region
          %s336 = sand.u32 %s34, 1
          %s337 = scalar_lea.sflag [#allocation3], %s336
          %s338 = sand.u32 %s34, 1
          %s339 = smul.addr %s338, 8
          %s340 = scalar_lea.vmem [#allocation2], %s339
          %s342 = ssub.s32 128, 128
          %343 = vsyncadd %s337, %s342
          %s344 = smul.addr %s24, 2
          %s345 = smul.addr %s344, 64
          %s346 = scalar_lea.hbm %s0, %s345
          %s348 = sshll.u32 %s340, 4
          %s349 = int_to_ptr.vmem [resolvable:$true] %s348
          %351 = dma.hbm_to_vmem [thread:$0]  %s346, 128, %s349, %s337
        $region52: #{tpu_custom_call.1} parent=47 // pred_fallthru
          _
      $region48: #{tpu_custom_call.1} parent=5 // pred_fallthru
        _
      %p352 = scmp.le.s32.totalorder 1, %s24
      %p353 = scmp.lt.s32.totalorder %s24, 3
      %p354 = pnand %p352, %p353
      %p355 = pneg %p354
      // Predicated region
      $region53: #{tpu_custom_call.1} parent=5 // pred_check
        _
      $region54: #{tpu_custom_call.1} parent=5 // pred_check_branch
        %357 = sbr.rel (%p354) target = $region56
      $region55: #{tpu_custom_call.1} parent=5 // pred_region
        %s358 = ssub.s32 %s24, 1
        %s359 = sand.u32 %s37, 1
        %s360 = scalar_lea.sflag [#allocation3], %s359
        %s361 = sand.u32 %s37, 1
        %s362 = smul.addr %s361, 8
        %s363 = scalar_lea.vmem [#allocation2], %s362
        // Predicated region
        $region57: #{tpu_custom_call.1} parent=55 // pred_check
          %p364 = pneg %p50
        $region58: #{tpu_custom_call.1} parent=55 // pred_check_branch
          %366 = sbr.rel (%p364) target = $region60
        $region59: #{tpu_custom_call.1} parent=55 // pred_region
          %367 = dma.done %s360, 128
        $region60: #{tpu_custom_call.1} parent=55 // pred_fallthru
          _
        // Predicated region
        $region61: #{tpu_custom_call.1} parent=55 // pred_check
          %p368 = pneg %p71
        $region62: #{tpu_custom_call.1} parent=55 // pred_check_branch
          %370 = sbr.rel (%p368) target = $region64
        $region63: #{tpu_custom_call.1} parent=55 // pred_region
          %371 = dma.done [#allocation6], 2048
        $region64: #{tpu_custom_call.1} parent=55 // pred_fallthru
          _
        // Predicated region
        $region65: #{tpu_custom_call.1} parent=55 // pred_check
          %p372 = pneg %p92
        $region66: #{tpu_custom_call.1} parent=55 // pred_check_branch
          %374 = sbr.rel (%p372) target = $region68
        $region67: #{tpu_custom_call.1} parent=55 // pred_region
          %375 = dma.done [#allocation6], 128
        $region68: #{tpu_custom_call.1} parent=55 // pred_fallthru
          _
        // Predicated region
        $region69: #{tpu_custom_call.1} parent=55 // pred_check
          %p376 = pneg %p113
        $region70: #{tpu_custom_call.1} parent=55 // pred_check_branch
          %378 = sbr.rel (%p376) target = $region72
        $region71: #{tpu_custom_call.1} parent=55 // pred_region
          %379 = dma.done [#allocation9], 4096
        $region72: #{tpu_custom_call.1} parent=55 // pred_fallthru
          _
        // Predicated region
        $region73: #{tpu_custom_call.1} parent=55 // pred_check
          %p380 = pneg %p176
        $region74: #{tpu_custom_call.1} parent=55 // pred_check_branch
          %382 = sbr.rel (%p380) target = $region76
        $region75: #{tpu_custom_call.1} parent=55 // pred_region
          %383 = dma.done [#allocation9], 64
        $region76: #{tpu_custom_call.1} parent=55 // pred_fallthru
          _
        // Predicated region
        $region77: #{tpu_custom_call.1} parent=55 // pred_check
          %p384 = pneg %p197
        $region78: #{tpu_custom_call.1} parent=55 // pred_check_branch
          %386 = sbr.rel (%p384) target = $region80
        $region79: #{tpu_custom_call.1} parent=55 // pred_region
          %387 = dma.done [#allocation12], 4096
        $region80: #{tpu_custom_call.1} parent=55 // pred_fallthru
          _
        %s388 = sand.u32 %s37, 1
        %s389 = scalar_lea.sflag [#allocation3], %s388
        %s390 = sand.u32 %s37, 1
        %s391 = smul.addr %s390, 8
        %s392 = scalar_lea.vmem [#allocation2], %s391
        %p393 = pneg %p50
        %p394 = pneg %p47
        %p395 = pneg %p71
        %p396 = pneg %p68
        %p397 = pneg %p92
        %p398 = pneg %p89
        %p399 = pneg %p113
        %p400 = pneg %p110
        %p401 = pneg %p134
        %p402 = pneg %p131
        %p403 = pneg %p155
        %p404 = pneg %p152
        %p405 = pneg %p176
        %p406 = pneg %p173
        %p407 = pneg %p197
        %p408 = pneg %p194
        %p409 = pneg %p218
        %p410 = pneg %p215
        %p411 = pneg %p244
        %p412 = pneg %p241
        %s413 = sand.u32 %s231, 1
        %s414 = scalar_lea.sflag [#allocation4], %s413
        %s415 = sand.u32 %s231, 1
        %s416 = smul.addr %s415, 8
        %s417 = scalar_lea.vmem [#allocation13], %s416
        %v419 = vld [vmem:[%s363] sm:$0xff]
        %v420 = vld [vmem:[#allocation5] sm:$0xf]
        %v421 = vld [vmem:[#allocation5 + $0x4] sm:$0xf]
        %v422 = vld [vmem:[#allocation5 + $0x8] sm:$0xf]
        %v423 = vld [vmem:[#allocation5 + $0xc] sm:$0xf]
        %v424 = vld [vmem:[#allocation5 + $0x10] sm:$0xf]
        %v425 = vld [vmem:[#allocation5 + $0x14] sm:$0xf]
        %v426 = vld [vmem:[#allocation5 + $0x18] sm:$0xf]
        %v427 = vld [vmem:[#allocation5 + $0x1c] sm:$0xf]
        %v428 = vld [vmem:[#allocation5 + $0x20] sm:$0xf]
        %v429 = vld [vmem:[#allocation5 + $0x24] sm:$0xf]
        %v430 = vld [vmem:[#allocation5 + $0x28] sm:$0xf]
        %v431 = vld [vmem:[#allocation5 + $0x2c] sm:$0xf]
        %v432 = vld [vmem:[#allocation5 + $0x30] sm:$0xf]
        %v433 = vld [vmem:[#allocation5 + $0x34] sm:$0xf]
        %v434 = vld [vmem:[#allocation5 + $0x38] sm:$0xf]
        %v435 = vld [vmem:[#allocation5 + $0x3c] sm:$0xf]
        %v436 = vld [vmem:[#allocation5 + $0x40] sm:$0xf]
        %v437 = vld [vmem:[#allocation5 + $0x44] sm:$0xf]
        %v438 = vld [vmem:[#allocation5 + $0x48] sm:$0xf]
        %v439 = vld [vmem:[#allocation5 + $0x4c] sm:$0xf]
        %v440 = vld [vmem:[#allocation5 + $0x50] sm:$0xf]
        %v441 = vld [vmem:[#allocation5 + $0x54] sm:$0xf]
        %v442 = vld [vmem:[#allocation5 + $0x58] sm:$0xf]
        %v443 = vld [vmem:[#allocation5 + $0x5c] sm:$0xf]
        %v444 = vld [vmem:[#allocation5 + $0x60] sm:$0xf]
        %v445 = vld [vmem:[#allocation5 + $0x64] sm:$0xf]
        %v446 = vld [vmem:[#allocation5 + $0x68] sm:$0xf]
        %v447 = vld [vmem:[#allocation5 + $0x6c] sm:$0xf]
        %v448 = vld [vmem:[#allocation5 + $0x70] sm:$0xf]
        %v449 = vld [vmem:[#allocation5 + $0x74] sm:$0xf]
        %v450 = vld [vmem:[#allocation5 + $0x78] sm:$0xf]
        %v451 = vld [vmem:[#allocation5 + $0x7c] sm:$0xf]
        %v452 = vld [vmem:[#allocation7] sm:$0xff]
        %v454 = vunpack.c.l.b16 %v419
        %v455 = vunpack.c.h.b16 %v419
        %v456 = vpack.c.b16 %v454, %v454
        %v457 = vpack.c.b16 %v455, %v455
        %v492 = vunpack.c.l.b16 %v420
        %v493 = vunpack.c.l.b16 %v421
        %v494 = vunpack.c.l.b16 %v422
        %v495 = vunpack.c.l.b16 %v423
        %v496 = vunpack.c.l.b16 %v424
        %v497 = vunpack.c.l.b16 %v425
        %v498 = vunpack.c.l.b16 %v426
        %v499 = vunpack.c.l.b16 %v427
        %v500 = vunpack.c.l.b16 %v428
        %v501 = vunpack.c.l.b16 %v429
        %v502 = vunpack.c.l.b16 %v430
        %v503 = vunpack.c.l.b16 %v431
        %v504 = vunpack.c.l.b16 %v432
        %v505 = vunpack.c.l.b16 %v433
        %v506 = vunpack.c.l.b16 %v434
        %v507 = vunpack.c.l.b16 %v435
        %v508 = vunpack.c.l.b16 %v436
        %v509 = vunpack.c.l.b16 %v437
        %v510 = vunpack.c.l.b16 %v438
        %v511 = vunpack.c.l.b16 %v439
        %v512 = vunpack.c.l.b16 %v440
        %v513 = vunpack.c.l.b16 %v441
        %v514 = vunpack.c.l.b16 %v442
        %v515 = vunpack.c.l.b16 %v443
        %v516 = vunpack.c.l.b16 %v444
        %v517 = vunpack.c.l.b16 %v445
        %v518 = vunpack.c.l.b16 %v446
        %v519 = vunpack.c.l.b16 %v447
        %v520 = vunpack.c.l.b16 %v448
        %v521 = vunpack.c.l.b16 %v449
        %v522 = vunpack.c.l.b16 %v450
        %v523 = vunpack.c.l.b16 %v451
        %v524 = vpack.c.b16 %v493, %v492
        %v525 = vpack.c.b16 %v495, %v494
        %v526 = vpack.c.b16 %v497, %v496
        %v527 = vpack.c.b16 %v499, %v498
        %v528 = vpack.c.b16 %v501, %v500
        %v529 = vpack.c.b16 %v503, %v502
        %v530 = vpack.c.b16 %v505, %v504
        %v531 = vpack.c.b16 %v507, %v506
        %v532 = vpack.c.b16 %v509, %v508
        %v533 = vpack.c.b16 %v511, %v510
        %v534 = vpack.c.b16 %v513, %v512
        %v535 = vpack.c.b16 %v515, %v514
        %v536 = vpack.c.b16 %v517, %v516
        %v537 = vpack.c.b16 %v519, %v518
        %v538 = vpack.c.b16 %v521, %v520
        %v539 = vpack.c.b16 %v523, %v522
        %556 = vmatprep.subr.bf16.mxu0 0
        %557 = vmatpush1.bf16.msra.mxu0 %v531
        %558 = vmatprep.subr.bf16.mxu0 0
        %559 = vmatpush1.bf16.msra.mxu0 %v530
        %560 = vmatprep.subr.bf16.mxu0 0
        %561 = vmatpush1.bf16.msra.mxu0 %v529
        %562 = vmatprep.subr.bf16.mxu0 0
        %563 = vmatpush1.bf16.msra.mxu0 %v528
        %564 = vmatprep.subr.bf16.mxu0 0
        %565 = vmatpush1.bf16.msra.mxu0 %v527
        %566 = vmatprep.subr.bf16.mxu0 0
        %567 = vmatpush1.bf16.msra.mxu0 %v526
        %568 = vmatprep.subr.bf16.mxu0 0
        %569 = vmatpush1.bf16.msra.mxu0 %v525
        %570 = vmatprep.subr.bf16.mxu0 0
        %571 = vmatpush1.bf16.msra.mxu0 %v524
        %572 = vmatprep.subr.bf16.mxu0 0
        %573 = vmatpush2.bf16.msra.mxu0 %v539
        %574 = vmatprep.subr.bf16.mxu0 0
        %575 = vmatpush2.bf16.msra.mxu0 %v538
        %576 = vmatprep.subr.bf16.mxu0 0
        %577 = vmatpush2.bf16.msra.mxu0 %v537
        %578 = vmatprep.subr.bf16.mxu0 0
        %579 = vmatpush2.bf16.msra.mxu0 %v536
        %580 = vmatprep.subr.bf16.mxu0 0
        %581 = vmatpush2.bf16.msra.mxu0 %v535
        %582 = vmatprep.subr.bf16.mxu0 0
        %583 = vmatpush2.bf16.msra.mxu0 %v534
        %584 = vmatprep.subr.bf16.mxu0 0
        %585 = vmatpush2.bf16.msra.mxu0 %v533
        %586 = vmatprep.subr.bf16.mxu0 0
        %587 = vmatpush2.bf16.msra.mxu0 %v532
        %588 = vmatprep.mubr.bf16.mxu0 %v457
        %589 = vmatmul.mubr.bf16.gmra.mxu0 %v456
        %v590 = vpop.f32.mrf.mxu0
        %v591 = vadd.f32 %v452, %v590
        %v592 = vpop.f32.mrf.mxu0
        %v593 = vpop.f32.mrf.mxu0
        %v594 = vpop.f32.mrf.mxu0
        %595 = vdwg.mxu0
        %v596 = vpack.c.bf16 %v591, %v591
        %v597 = vld [vmem:[#allocation8] sm:$0xff]
        %v598 = vld [vmem:[#allocation8 + $0x8] sm:$0xff]
        %v599 = vld [vmem:[#allocation8 + $0x10] sm:$0xff]
        %v600 = vld [vmem:[#allocation8 + $0x18] sm:$0xff]
        %v601 = vld [vmem:[#allocation8 + $0x20] sm:$0xff]
        %v602 = vld [vmem:[#allocation8 + $0x28] sm:$0xff]
        %v603 = vld [vmem:[#allocation8 + $0x30] sm:$0xff]
        %v604 = vld [vmem:[#allocation8 + $0x38] sm:$0xff]
        %v605 = vld [vmem:[#allocation8 + $0x40] sm:$0xff]
        %v606 = vld [vmem:[#allocation8 + $0x48] sm:$0xff]
        %v607 = vld [vmem:[#allocation8 + $0x50] sm:$0xff]
        %v608 = vld [vmem:[#allocation8 + $0x58] sm:$0xff]
        %v609 = vld [vmem:[#allocation8 + $0x60] sm:$0xff]
        %v610 = vld [vmem:[#allocation8 + $0x68] sm:$0xff]
        %v611 = vld [vmem:[#allocation8 + $0x70] sm:$0xff]
        %v612 = vld [vmem:[#allocation8 + $0x78] sm:$0xff]
        %v613 = vld [vmem:[#allocation8 + $0x80] sm:$0xff]
        %v614 = vld [vmem:[#allocation8 + $0x88] sm:$0xff]
        %v615 = vld [vmem:[#allocation8 + $0x90] sm:$0xff]
        %v616 = vld [vmem:[#allocation8 + $0x98] sm:$0xff]
        %v617 = vld [vmem:[#allocation8 + $0xa0] sm:$0xff]
        %v618 = vld [vmem:[#allocation8 + $0xa8] sm:$0xff]
        %v619 = vld [vmem:[#allocation8 + $0xb0] sm:$0xff]
        %v620 = vld [vmem:[#allocation8 + $0xb8] sm:$0xff]
        %v621 = vld [vmem:[#allocation8 + $0xc0] sm:$0xff]
        %v622 = vld [vmem:[#allocation8 + $0xc8] sm:$0xff]
        %v623 = vld [vmem:[#allocation8 + $0xd0] sm:$0xff]
        %v624 = vld [vmem:[#allocation8 + $0xd8] sm:$0xff]
        %v625 = vld [vmem:[#allocation8 + $0xe0] sm:$0xff]
        %v626 = vld [vmem:[#allocation8 + $0xe8] sm:$0xff]
        %v627 = vld [vmem:[#allocation8 + $0xf0] sm:$0xff]
        %v628 = vld [vmem:[#allocation8 + $0xf8] sm:$0xff]
        %v629 = vld [vmem:[%s4] sm:$0xf]
        %v631 = vlaneseq
        %v632 = vshrl.u32 %v631, 7
        %v633 = vsub.s32 0, %v632
        %v634 = vrot.slane %v629, %v633
        %v635 = vlaneseq
        %v636 = vshrl.u32 %v635, 7
        %v637 = vsub.s32 1, %v636
        %v638 = vrot.slane %v629, %v637
        %v639 = vlaneseq
        %v640 = vshrl.u32 %v639, 7
        %v641 = vsub.s32 2, %v640
        %v642 = vrot.slane %v629, %v641
        %v643 = vlaneseq
        %v644 = vshrl.u32 %v643, 7
        %v645 = vsub.s32 3, %v644
        %v646 = vrot.slane %v629, %v645
        %v683 = vunpack.c.l.b16 %v597
        %v684 = vunpack.c.h.b16 %v597
        %v685 = vunpack.c.l.b16 %v598
        %v686 = vunpack.c.h.b16 %v598
        %v687 = vunpack.c.l.b16 %v599
        %v688 = vunpack.c.h.b16 %v599
        %v689 = vunpack.c.l.b16 %v600
        %v690 = vunpack.c.h.b16 %v600
        %v691 = vunpack.c.l.b16 %v601
        %v692 = vunpack.c.h.b16 %v601
        %v693 = vunpack.c.l.b16 %v602
        %v694 = vunpack.c.h.b16 %v602
        %v695 = vunpack.c.l.b16 %v603
        %v696 = vunpack.c.h.b16 %v603
        %v697 = vunpack.c.l.b16 %v604
        %v698 = vunpack.c.h.b16 %v604
        %v699 = vunpack.c.l.b16 %v605
        %v700 = vunpack.c.h.b16 %v605
        %v701 = vunpack.c.l.b16 %v606
        %v702 = vunpack.c.h.b16 %v606
        %v703 = vunpack.c.l.b16 %v607
        %v704 = vunpack.c.h.b16 %v607
        %v705 = vunpack.c.l.b16 %v608
        %v706 = vunpack.c.h.b16 %v608
        %v707 = vunpack.c.l.b16 %v609
        %v708 = vunpack.c.h.b16 %v609
        %v709 = vunpack.c.l.b16 %v610
        %v710 = vunpack.c.h.b16 %v610
        %v711 = vunpack.c.l.b16 %v611
        %v712 = vunpack.c.h.b16 %v611
        %v713 = vunpack.c.l.b16 %v612
        %v714 = vunpack.c.h.b16 %v612
        %v715 = vunpack.c.l.b16 %v613
        %v716 = vunpack.c.h.b16 %v613
        %v717 = vunpack.c.l.b16 %v614
        %v718 = vunpack.c.h.b16 %v614
        %v719 = vunpack.c.l.b16 %v615
        %v720 = vunpack.c.h.b16 %v615
        %v721 = vunpack.c.l.b16 %v616
        %v722 = vunpack.c.h.b16 %v616
        %v723 = vunpack.c.l.b16 %v617
        %v724 = vunpack.c.h.b16 %v617
        %v725 = vunpack.c.l.b16 %v618
        %v726 = vunpack.c.h.b16 %v618
        %v727 = vunpack.c.l.b16 %v619
        %v728 = vunpack.c.h.b16 %v619
        %v729 = vunpack.c.l.b16 %v620
        %v730 = vunpack.c.h.b16 %v620
        %v731 = vunpack.c.l.b16 %v621
        %v732 = vunpack.c.h.b16 %v621
        %v733 = vunpack.c.l.b16 %v622
        %v734 = vunpack.c.h.b16 %v622
        %v735 = vunpack.c.l.b16 %v623
        %v736 = vunpack.c.h.b16 %v623
        %v737 = vunpack.c.l.b16 %v624
        %v738 = vunpack.c.h.b16 %v624
        %v739 = vunpack.c.l.b16 %v625
        %v740 = vunpack.c.h.b16 %v625
        %v741 = vunpack.c.l.b16 %v626
        %v742 = vunpack.c.h.b16 %v626
        %v743 = vunpack.c.l.b16 %v627
        %v744 = vunpack.c.h.b16 %v627
        %v745 = vunpack.c.l.b16 %v628
        %v746 = vunpack.c.h.b16 %v628
        %v747 = vpack.c.b16 %v687, %v683
        %v748 = vpack.c.b16 %v688, %v684
        %v749 = vpack.c.b16 %v689, %v685
        %v750 = vpack.c.b16 %v690, %v686
        %v751 = vpack.c.b16 %v695, %v691
        %v752 = vpack.c.b16 %v696, %v692
        %v753 = vpack.c.b16 %v697, %v693
        %v754 = vpack.c.b16 %v698, %v694
        %v755 = vpack.c.b16 %v703, %v699
        %v756 = vpack.c.b16 %v704, %v700
        %v757 = vpack.c.b16 %v705, %v701
        %v758 = vpack.c.b16 %v706, %v702
        %v759 = vpack.c.b16 %v711, %v707
        %v760 = vpack.c.b16 %v712, %v708
        %v761 = vpack.c.b16 %v713, %v709
        %v762 = vpack.c.b16 %v714, %v710
        %v763 = vpack.c.b16 %v719, %v715
        %v764 = vpack.c.b16 %v720, %v716
        %v765 = vpack.c.b16 %v721, %v717
        %v766 = vpack.c.b16 %v722, %v718
        %v767 = vpack.c.b16 %v727, %v723
        %v768 = vpack.c.b16 %v728, %v724
        %v769 = vpack.c.b16 %v729, %v725
        %v770 = vpack.c.b16 %v730, %v726
        %v771 = vpack.c.b16 %v735, %v731
        %v772 = vpack.c.b16 %v736, %v732
        %v773 = vpack.c.b16 %v737, %v733
        %v774 = vpack.c.b16 %v738, %v734
        %v775 = vpack.c.b16 %v743, %v739
        %v776 = vpack.c.b16 %v744, %v740
        %v777 = vpack.c.b16 %v745, %v741
        %v778 = vpack.c.b16 %v746, %v742
        %811 = vmatprep.subr.bf16.mxu0 %v776
        %812 = vmatpush1.bf16.msra.mxu0 %v775
        %813 = vmatprep.subr.bf16.mxu0 %v772
        %814 = vmatpush1.bf16.msra.mxu0 %v771
        %815 = vmatprep.subr.bf16.mxu0 %v768
        %816 = vmatpush1.bf16.msra.mxu0 %v767
        %817 = vmatprep.subr.bf16.mxu0 %v764
        %818 = vmatpush1.bf16.msra.mxu0 %v763
        %819 = vmatprep.subr.bf16.mxu0 %v760
        %820 = vmatpush1.bf16.msra.mxu0 %v759
        %821 = vmatprep.subr.bf16.mxu0 %v756
        %822 = vmatpush1.bf16.msra.mxu0 %v755
        %823 = vmatprep.subr.bf16.mxu0 %v752
        %824 = vmatpush1.bf16.msra.mxu0 %v751
        %825 = vmatprep.subr.bf16.mxu0 %v748
        %826 = vmatpush1.bf16.msra.mxu0 %v747
        %827 = vmatprep.subr.bf16.mxu0 0
        %828 = vmatpush2.bf16.msra.mxu0 0
        %829 = vmatprep.subr.bf16.mxu0 0
        %830 = vmatpush2.bf16.msra.mxu0 0
        %831 = vmatprep.subr.bf16.mxu0 0
        %832 = vmatpush2.bf16.msra.mxu0 0
        %833 = vmatprep.subr.bf16.mxu0 0
        %834 = vmatpush2.bf16.msra.mxu0 0
        %835 = vmatprep.subr.bf16.mxu0 0
        %836 = vmatpush2.bf16.msra.mxu0 0
        %837 = vmatprep.subr.bf16.mxu0 0
        %838 = vmatpush2.bf16.msra.mxu0 0
        %839 = vmatprep.subr.bf16.mxu0 0
        %840 = vmatpush2.bf16.msra.mxu0 0
        %841 = vmatprep.subr.bf16.mxu0 0
        %842 = vmatpush2.bf16.msra.mxu0 0
        %843 = vmatprep.mubr.bf16.mxu0 0
        %844 = vmatmul.mubr.bf16.gmra.mxu0 %v596
        %v845 = vpop.f32.mrf.mxu0
        %v846 = vadd.f32 %v634, %v845
        %v847 = vpop.f32.mrf.mxu0
        %v848 = vadd.f32 %v638, %v847
        %v849 = vpop.f32.mrf.mxu0
        %v850 = vpop.f32.mrf.mxu0
        %851 = vdwg.mxu0
        %852 = vmatprep.subr.bf16.mxu0 %v778
        %853 = vmatpush1.bf16.msra.mxu0 %v777
        %854 = vmatprep.subr.bf16.mxu0 %v774
        %855 = vmatpush1.bf16.msra.mxu0 %v773
        %856 = vmatprep.subr.bf16.mxu0 %v770
        %857 = vmatpush1.bf16.msra.mxu0 %v769
        %858 = vmatprep.subr.bf16.mxu0 %v766
        %859 = vmatpush1.bf16.msra.mxu0 %v765
        %860 = vmatprep.subr.bf16.mxu0 %v762
        %861 = vmatpush1.bf16.msra.mxu0 %v761
        %862 = vmatprep.subr.bf16.mxu0 %v758
        %863 = vmatpush1.bf16.msra.mxu0 %v757
        %864 = vmatprep.subr.bf16.mxu0 %v754
        %865 = vmatpush1.bf16.msra.mxu0 %v753
        %866 = vmatprep.subr.bf16.mxu0 %v750
        %867 = vmatpush1.bf16.msra.mxu0 %v749
        %868 = vmatprep.subr.bf16.mxu0 0
        %869 = vmatpush2.bf16.msra.mxu0 0
        %870 = vmatprep.subr.bf16.mxu0 0
        %871 = vmatpush2.bf16.msra.mxu0 0
        %872 = vmatprep.subr.bf16.mxu0 0
        %873 = vmatpush2.bf16.msra.mxu0 0
        %874 = vmatprep.subr.bf16.mxu0 0
        %875 = vmatpush2.bf16.msra.mxu0 0
        %876 = vmatprep.subr.bf16.mxu0 0
        %877 = vmatpush2.bf16.msra.mxu0 0
        %878 = vmatprep.subr.bf16.mxu0 0
        %879 = vmatpush2.bf16.msra.mxu0 0
        %880 = vmatprep.subr.bf16.mxu0 0
        %881 = vmatpush2.bf16.msra.mxu0 0
        %882 = vmatprep.subr.bf16.mxu0 0
        %883 = vmatpush2.bf16.msra.mxu0 0
        %884 = vmatprep.mubr.bf16.mxu0 0
        %885 = vmatmul.mubr.bf16.gmra.mxu0 %v596
        %v886 = vpop.f32.mrf.mxu0
        %v887 = vadd.f32 %v642, %v886
        %v888 = vpop.f32.mrf.mxu0
        %v889 = vadd.f32 %v646, %v888
        %v890 = vpop.f32.mrf.mxu0
        %v891 = vpop.f32.mrf.mxu0
        %892 = vdwg.mxu0
        %v893 = vadd.f32 %v846, %v848
        %v894 = vadd.f32 %v893, %v887
        %v895 = vadd.f32 %v894, %v889
        %896 = vadd.xlane.f32.xlu0 %v895
        %v897 = vpop.xlane.xlu0 %896
        %v898 = vrcp.pop 512.0
        %v899 = vmul.f32 %v897, %v898
        %v900 = vsub.f32 %v846, %v899
        %v901 = vsub.f32 %v848, %v899
        %v902 = vsub.f32 %v887, %v899
        %v903 = vsub.f32 %v889, %v899
        %v904 = vmul.f32 %v900, %v900
        %v905 = vmul.f32 %v901, %v901
        %v906 = vmul.f32 %v902, %v902
        %v907 = vmul.f32 %v903, %v903
        %v908 = vadd.f32 %v904, %v905
        %v909 = vadd.f32 %v908, %v906
        %v910 = vadd.f32 %v909, %v907
        %911 = vadd.xlane.f32.xlu0 %v910
        %v912 = vpop.xlane.xlu0 %911
        %v913 = vmul.f32 %v912, %v898
        %v914 = vadd.f32 %v913, 1e-06
        %v915 = vrsqrt.pop %v914
        %v916 = vmul.f32 %v900, %v915
        %v917 = vmul.f32 %v901, %v915
        %v918 = vmul.f32 %v902, %v915
        %v919 = vmul.f32 %v903, %v915
        %v920 = vld [vmem:[%s5] sm:$0xf]
        %v922 = vlaneseq
        %v923 = vshrl.u32 %v922, 7
        %v924 = vsub.s32 0, %v923
        %v925 = vrot.slane %v920, %v924
        %v926 = vlaneseq
        %v927 = vshrl.u32 %v926, 7
        %v928 = vsub.s32 1, %v927
        %v929 = vrot.slane %v920, %v928
        %v930 = vlaneseq
        %v931 = vshrl.u32 %v930, 7
        %v932 = vsub.s32 2, %v931
        %v933 = vrot.slane %v920, %v932
        %v934 = vlaneseq
        %v935 = vshrl.u32 %v934, 7
        %v936 = vsub.s32 3, %v935
        %v937 = vrot.slane %v920, %v936
        %v942 = vmul.f32 %v916, %v925
        %v943 = vmul.f32 %v917, %v929
        %v944 = vmul.f32 %v918, %v933
        %v945 = vmul.f32 %v919, %v937
        %v946 = vld [vmem:[#allocation10] sm:$0xf]
        %v948 = vlaneseq
        %v949 = vshrl.u32 %v948, 7
        %v950 = vsub.s32 0, %v949
        %v951 = vrot.slane %v946, %v950
        %v952 = vlaneseq
        %v953 = vshrl.u32 %v952, 7
        %v954 = vsub.s32 1, %v953
        %v955 = vrot.slane %v946, %v954
        %v956 = vlaneseq
        %v957 = vshrl.u32 %v956, 7
        %v958 = vsub.s32 2, %v957
        %v959 = vrot.slane %v946, %v958
        %v960 = vlaneseq
        %v961 = vshrl.u32 %v960, 7
        %v962 = vsub.s32 3, %v961
        %v963 = vrot.slane %v946, %v962
        %v968 = vadd.f32 %v942, %v951
        %v969 = vadd.f32 %v943, %v955
        %v970 = vadd.f32 %v944, %v959
        %v971 = vadd.f32 %v945, %v963
        %v972 = vmul.f32 %v968, 0.5
        %v973 = vmul.f32 %v969, 0.5
        %v974 = vmul.f32 %v970, 0.5
        %v975 = vmul.f32 %v971, 0.5
        %v976 = vmul.f32 %v968, 0.70710677
        %v977 = vmul.f32 %v969, 0.70710677
        %v978 = vmul.f32 %v970, 0.70710677
        %v979 = vmul.f32 %v971, 0.70710677
        %v980 = verf.f32.pop %v976
        %v981 = verf.f32.pop %v977
        %v982 = verf.f32.pop %v978
        %v983 = verf.f32.pop %v979
        %v984 = vadd.f32 %v980, 1.0
        %v985 = vadd.f32 %v981, 1.0
        %v986 = vadd.f32 %v982, 1.0
        %v987 = vadd.f32 %v983, 1.0
        %v988 = vmul.f32 %v972, %v984
        %v989 = vmul.f32 %v973, %v985
        %v990 = vmul.f32 %v974, %v986
        %v991 = vmul.f32 %v975, %v987
        %v992 = vpack.c.bf16 %v988, %v988
        %v993 = vpack.c.bf16 %v989, %v989
        %v994 = vpack.c.bf16 %v990, %v990
        %v995 = vpack.c.bf16 %v991, %v991
        %v996 = vld [vmem:[#allocation11] sm:$0xf]
        %v997 = vld [vmem:[#allocation11 + $0x4] sm:$0xf]
        %v998 = vld [vmem:[#allocation11 + $0x8] sm:$0xf]
        %v999 = vld [vmem:[#allocation11 + $0xc] sm:$0xf]
        %v1000 = vld [vmem:[#allocation11 + $0x10] sm:$0xf]
        %v1001 = vld [vmem:[#allocation11 + $0x14] sm:$0xf]
        %v1002 = vld [vmem:[#allocation11 + $0x18] sm:$0xf]
        %v1003 = vld [vmem:[#allocation11 + $0x1c] sm:$0xf]
        %v1004 = vld [vmem:[#allocation11 + $0x20] sm:$0xf]
        %v1005 = vld [vmem:[#allocation11 + $0x24] sm:$0xf]
        %v1006 = vld [vmem:[#allocation11 + $0x28] sm:$0xf]
        %v1007 = vld [vmem:[#allocation11 + $0x2c] sm:$0xf]
        %v1008 = vld [vmem:[#allocation11 + $0x30] sm:$0xf]
        %v1009 = vld [vmem:[#allocation11 + $0x34] sm:$0xf]
        %v1010 = vld [vmem:[#allocation11 + $0x38] sm:$0xf]
        %v1011 = vld [vmem:[#allocation11 + $0x3c] sm:$0xf]
        %v1012 = vld [vmem:[#allocation11 + $0x40] sm:$0xf]
        %v1013 = vld [vmem:[#allocation11 + $0x44] sm:$0xf]
        %v1014 = vld [vmem:[#allocation11 + $0x48] sm:$0xf]
        %v1015 = vld [vmem:[#allocation11 + $0x4c] sm:$0xf]
        %v1016 = vld [vmem:[#allocation11 + $0x50] sm:$0xf]
        %v1017 = vld [vmem:[#allocation11 + $0x54] sm:$0xf]
        %v1018 = vld [vmem:[#allocation11 + $0x58] sm:$0xf]
        %v1019 = vld [vmem:[#allocation11 + $0x5c] sm:$0xf]
        %v1020 = vld [vmem:[#allocation11 + $0x60] sm:$0xf]
        %v1021 = vld [vmem:[#allocation11 + $0x64] sm:$0xf]
        %v1022 = vld [vmem:[#allocation11 + $0x68] sm:$0xf]
        %v1023 = vld [vmem:[#allocation11 + $0x6c] sm:$0xf]
        %v1024 = vld [vmem:[#allocation11 + $0x70] sm:$0xf]
        %v1025 = vld [vmem:[#allocation11 + $0x74] sm:$0xf]
        %v1026 = vld [vmem:[#allocation11 + $0x78] sm:$0xf]
        %v1027 = vld [vmem:[#allocation11 + $0x7c] sm:$0xf]
        %v1028 = vld [vmem:[#allocation11 + $0x80] sm:$0xf]
        %v1029 = vld [vmem:[#allocation11 + $0x84] sm:$0xf]
        %v1030 = vld [vmem:[#allocation11 + $0x88] sm:$0xf]
        %v1031 = vld [vmem:[#allocation11 + $0x8c] sm:$0xf]
        %v1032 = vld [vmem:[#allocation11 + $0x90] sm:$0xf]
        %v1033 = vld [vmem:[#allocation11 + $0x94] sm:$0xf]
        %v1034 = vld [vmem:[#allocation11 + $0x98] sm:$0xf]
        %v1035 = vld [vmem:[#allocation11 + $0x9c] sm:$0xf]
        %v1036 = vld [vmem:[#allocation11 + $0xa0] sm:$0xf]
        %v1037 = vld [vmem:[#allocation11 + $0xa4] sm:$0xf]
        %v1038 = vld [vmem:[#allocation11 + $0xa8] sm:$0xf]
        %v1039 = vld [vmem:[#allocation11 + $0xac] sm:$0xf]
        %v1040 = vld [vmem:[#allocation11 + $0xb0] sm:$0xf]
        %v1041 = vld [vmem:[#allocation11 + $0xb4] sm:$0xf]
        %v1042 = vld [vmem:[#allocation11 + $0xb8] sm:$0xf]
        %v1043 = vld [vmem:[#allocation11 + $0xbc] sm:$0xf]
        %v1044 = vld [vmem:[#allocation11 + $0xc0] sm:$0xf]
        %v1045 = vld [vmem:[#allocation11 + $0xc4] sm:$0xf]
        %v1046 = vld [vmem:[#allocation11 + $0xc8] sm:$0xf]
        %v1047 = vld [vmem:[#allocation11 + $0xcc] sm:$0xf]
        %v1048 = vld [vmem:[#allocation11 + $0xd0] sm:$0xf]
        %v1049 = vld [vmem:[#allocation11 + $0xd4] sm:$0xf]
        %v1050 = vld [vmem:[#allocation11 + $0xd8] sm:$0xf]
        %v1051 = vld [vmem:[#allocation11 + $0xdc] sm:$0xf]
        %v1052 = vld [vmem:[#allocation11 + $0xe0] sm:$0xf]
        %v1053 = vld [vmem:[#allocation11 + $0xe4] sm:$0xf]
        %v1054 = vld [vmem:[#allocation11 + $0xe8] sm:$0xf]
        %v1055 = vld [vmem:[#allocation11 + $0xec] sm:$0xf]
        %v1056 = vld [vmem:[#allocation11 + $0xf0] sm:$0xf]
        %v1057 = vld [vmem:[#allocation11 + $0xf4] sm:$0xf]
        %v1058 = vld [vmem:[#allocation11 + $0xf8] sm:$0xf]
        %v1059 = vld [vmem:[#allocation11 + $0xfc] sm:$0xf]
        %v1060 = vld [vmem:[%s8] sm:$0x1]
        %v1062 = vlaneseq
        %v1063 = vshrl.u32 %v1062, 7
        %v1064 = vsub.s32 0, %v1063
        %v1065 = vrot.slane %v1060, %v1064
        %v1131 = vunpack.c.l.b16 %v996
        %v1132 = vunpack.c.l.b16 %v997
        %v1133 = vunpack.c.l.b16 %v998
        %v1134 = vunpack.c.l.b16 %v999
        %v1135 = vunpack.c.l.b16 %v1000
        %v1136 = vunpack.c.l.b16 %v1001
        %v1137 = vunpack.c.l.b16 %v1002
        %v1138 = vunpack.c.l.b16 %v1003
        %v1139 = vunpack.c.l.b16 %v1004
        %v1140 = vunpack.c.l.b16 %v1005
        %v1141 = vunpack.c.l.b16 %v1006
        %v1142 = vunpack.c.l.b16 %v1007
        %v1143 = vunpack.c.l.b16 %v1008
        %v1144 = vunpack.c.l.b16 %v1009
        %v1145 = vunpack.c.l.b16 %v1010
        %v1146 = vunpack.c.l.b16 %v1011
        %v1147 = vunpack.c.l.b16 %v1012
        %v1148 = vunpack.c.l.b16 %v1013
        %v1149 = vunpack.c.l.b16 %v1014
        %v1150 = vunpack.c.l.b16 %v1015
        %v1151 = vunpack.c.l.b16 %v1016
        %v1152 = vunpack.c.l.b16 %v1017
        %v1153 = vunpack.c.l.b16 %v1018
        %v1154 = vunpack.c.l.b16 %v1019
        %v1155 = vunpack.c.l.b16 %v1020
        %v1156 = vunpack.c.l.b16 %v1021
        %v1157 = vunpack.c.l.b16 %v1022
        %v1158 = vunpack.c.l.b16 %v1023
        %v1159 = vunpack.c.l.b16 %v1024
        %v1160 = vunpack.c.l.b16 %v1025
        %v1161 = vunpack.c.l.b16 %v1026
        %v1162 = vunpack.c.l.b16 %v1027
        %v1163 = vunpack.c.l.b16 %v1028
        %v1164 = vunpack.c.l.b16 %v1029
        %v1165 = vunpack.c.l.b16 %v1030
        %v1166 = vunpack.c.l.b16 %v1031
        %v1167 = vunpack.c.l.b16 %v1032
        %v1168 = vunpack.c.l.b16 %v1033
        %v1169 = vunpack.c.l.b16 %v1034
        %v1170 = vunpack.c.l.b16 %v1035
        %v1171 = vunpack.c.l.b16 %v1036
        %v1172 = vunpack.c.l.b16 %v1037
        %v1173 = vunpack.c.l.b16 %v1038
        %v1174 = vunpack.c.l.b16 %v1039
        %v1175 = vunpack.c.l.b16 %v1040
        %v1176 = vunpack.c.l.b16 %v1041
        %v1177 = vunpack.c.l.b16 %v1042
        %v1178 = vunpack.c.l.b16 %v1043
        %v1179 = vunpack.c.l.b16 %v1044
        %v1180 = vunpack.c.l.b16 %v1045
        %v1181 = vunpack.c.l.b16 %v1046
        %v1182 = vunpack.c.l.b16 %v1047
        %v1183 = vunpack.c.l.b16 %v1048
        %v1184 = vunpack.c.l.b16 %v1049
        %v1185 = vunpack.c.l.b16 %v1050
        %v1186 = vunpack.c.l.b16 %v1051
        %v1187 = vunpack.c.l.b16 %v1052
        %v1188 = vunpack.c.l.b16 %v1053
        %v1189 = vunpack.c.l.b16 %v1054
        %v1190 = vunpack.c.l.b16 %v1055
        %v1191 = vunpack.c.l.b16 %v1056
        %v1192 = vunpack.c.l.b16 %v1057
        %v1193 = vunpack.c.l.b16 %v1058
        %v1194 = vunpack.c.l.b16 %v1059
        %v1195 = vpack.c.b16 %v1132, %v1131
        %v1196 = vpack.c.b16 %v1134, %v1133
        %v1197 = vpack.c.b16 %v1136, %v1135
        %v1198 = vpack.c.b16 %v1138, %v1137
        %v1199 = vpack.c.b16 %v1140, %v1139
        %v1200 = vpack.c.b16 %v1142, %v1141
        %v1201 = vpack.c.b16 %v1144, %v1143
        %v1202 = vpack.c.b16 %v1146, %v1145
        %v1203 = vpack.c.b16 %v1148, %v1147
        %v1204 = vpack.c.b16 %v1150, %v1149
        %v1205 = vpack.c.b16 %v1152, %v1151
        %v1206 = vpack.c.b16 %v1154, %v1153
        %v1207 = vpack.c.b16 %v1156, %v1155
        %v1208 = vpack.c.b16 %v1158, %v1157
        %v1209 = vpack.c.b16 %v1160, %v1159
        %v1210 = vpack.c.b16 %v1162, %v1161
        %v1211 = vpack.c.b16 %v1164, %v1163
        %v1212 = vpack.c.b16 %v1166, %v1165
        %v1213 = vpack.c.b16 %v1168, %v1167
        %v1214 = vpack.c.b16 %v1170, %v1169
        %v1215 = vpack.c.b16 %v1172, %v1171
        %v1216 = vpack.c.b16 %v1174, %v1173
        %v1217 = vpack.c.b16 %v1176, %v1175
        %v1218 = vpack.c.b16 %v1178, %v1177
        %v1219 = vpack.c.b16 %v1180, %v1179
        %v1220 = vpack.c.b16 %v1182, %v1181
        %v1221 = vpack.c.b16 %v1184, %v1183
        %v1222 = vpack.c.b16 %v1186, %v1185
        %v1223 = vpack.c.b16 %v1188, %v1187
        %v1224 = vpack.c.b16 %v1190, %v1189
        %v1225 = vpack.c.b16 %v1192, %v1191
        %v1226 = vpack.c.b16 %v1194, %v1193
        %1259 = vmatprep.subr.bf16.mxu0 0
        %1260 = vmatpush1.bf16.msra.mxu0 %v1202
        %1261 = vmatprep.subr.bf16.mxu0 0
        %1262 = vmatpush1.bf16.msra.mxu0 %v1201
        %1263 = vmatprep.subr.bf16.mxu0 0
        %1264 = vmatpush1.bf16.msra.mxu0 %v1200
        %1265 = vmatprep.subr.bf16.mxu0 0
        %1266 = vmatpush1.bf16.msra.mxu0 %v1199
        %1267 = vmatprep.subr.bf16.mxu0 0
        %1268 = vmatpush1.bf16.msra.mxu0 %v1198
        %1269 = vmatprep.subr.bf16.mxu0 0
        %1270 = vmatpush1.bf16.msra.mxu0 %v1197
        %1271 = vmatprep.subr.bf16.mxu0 0
        %1272 = vmatpush1.bf16.msra.mxu0 %v1196
        %1273 = vmatprep.subr.bf16.mxu0 0
        %1274 = vmatpush1.bf16.msra.mxu0 %v1195
        %1275 = vmatprep.subr.bf16.mxu0 0
        %1276 = vmatpush2.bf16.msra.mxu0 %v1210
        %1277 = vmatprep.subr.bf16.mxu0 0
        %1278 = vmatpush2.bf16.msra.mxu0 %v1209
        %1279 = vmatprep.subr.bf16.mxu0 0
        %1280 = vmatpush2.bf16.msra.mxu0 %v1208
        %1281 = vmatprep.subr.bf16.mxu0 0
        %1282 = vmatpush2.bf16.msra.mxu0 %v1207
        %1283 = vmatprep.subr.bf16.mxu0 0
        %1284 = vmatpush2.bf16.msra.mxu0 %v1206
        %1285 = vmatprep.subr.bf16.mxu0 0
        %1286 = vmatpush2.bf16.msra.mxu0 %v1205
        %1287 = vmatprep.subr.bf16.mxu0 0
        %1288 = vmatpush2.bf16.msra.mxu0 %v1204
        %1289 = vmatprep.subr.bf16.mxu0 0
        %1290 = vmatpush2.bf16.msra.mxu0 %v1203
        %1291 = vmatprep.mubr.bf16.mxu0 %v993
        %1292 = vmatmul.mubr.bf16.gmra.mxu0 %v992
        %v1293 = vpop.f32.mrf.mxu0
        %v1294 = vadd.f32 %v1065, %v1293
        %v1295 = vpop.f32.mrf.mxu0
        %v1296 = vpop.f32.mrf.mxu0
        %v1297 = vpop.f32.mrf.mxu0
        %1298 = vdwg.mxu0
        %1299 = vmatprep.subr.bf16.mxu0 0
        %1300 = vmatpush1.bf16.msra.mxu0 %v1218
        %1301 = vmatprep.subr.bf16.mxu0 0
        %1302 = vmatpush1.bf16.msra.mxu0 %v1217
        %1303 = vmatprep.subr.bf16.mxu0 0
        %1304 = vmatpush1.bf16.msra.mxu0 %v1216
        %1305 = vmatprep.subr.bf16.mxu0 0
        %1306 = vmatpush1.bf16.msra.mxu0 %v1215
        %1307 = vmatprep.subr.bf16.mxu0 0
        %1308 = vmatpush1.bf16.msra.mxu0 %v1214
        %1309 = vmatprep.subr.bf16.mxu0 0
        %1310 = vmatpush1.bf16.msra.mxu0 %v1213
        %1311 = vmatprep.subr.bf16.mxu0 0
        %1312 = vmatpush1.bf16.msra.mxu0 %v1212
        %1313 = vmatprep.subr.bf16.mxu0 0
        %1314 = vmatpush1.bf16.msra.mxu0 %v1211
        %1315 = vmatprep.subr.bf16.mxu0 0
        %1316 = vmatpush2.bf16.msra.mxu0 %v1226
        %1317 = vmatprep.subr.bf16.mxu0 0
        %1318 = vmatpush2.bf16.msra.mxu0 %v1225
        %1319 = vmatprep.subr.bf16.mxu0 0
        %1320 = vmatpush2.bf16.msra.mxu0 %v1224
        %1321 = vmatprep.subr.bf16.mxu0 0
        %1322 = vmatpush2.bf16.msra.mxu0 %v1223
        %1323 = vmatprep.subr.bf16.mxu0 0
        %1324 = vmatpush2.bf16.msra.mxu0 %v1222
        %1325 = vmatprep.subr.bf16.mxu0 0
        %1326 = vmatpush2.bf16.msra.mxu0 %v1221
        %1327 = vmatprep.subr.bf16.mxu0 0
        %1328 = vmatpush2.bf16.msra.mxu0 %v1220
        %1329 = vmatprep.subr.bf16.mxu0 0
        %1330 = vmatpush2.bf16.msra.mxu0 %v1219
        %1331 = vmatprep.mubr.bf16.mxu0 %v995
        %1332 = vmatmul.mubr.bf16.gmra.mxu0 %v994
        %v1333 = vpop.f32.mrf.mxu0
        %v1334 = vadd.f32 %v1294, %v1333
        %v1335 = vpop.f32.mrf.mxu0
        %v1336 = vpop.f32.mrf.mxu0
        %v1337 = vpop.f32.mrf.mxu0
        %1338 = vdwg.mxu0
        %1339 = vst [vmem:[%s417] sm:$0xff] %v1334
        %s1340 = sand.u32 %s231, 1
        %s1341 = scalar_lea.sflag [#allocation4], %s1340
        %s1342 = sand.u32 %s231, 1
        %s1343 = smul.addr %s1342, 8
        %s1344 = scalar_lea.vmem [#allocation13], %s1343
        // Predicated region
        $region81: #{tpu_custom_call.1} parent=55 // pred_check
          %p1345 = pneg %p241
        $region82: #{tpu_custom_call.1} parent=55 // pred_check_branch
          %1347 = sbr.rel (%p1345) target = $region84
        $region83: #{tpu_custom_call.1} parent=55 // pred_region
          %s1349 = ssub.s32 128, 128
          %1350 = vsyncadd %s1341, %s1349
          %s1351 = smul.addr %s29, 128
          %s1352 = scalar_lea.hbm %s9, %s1351
          %s1354 = sshll.u32 %s1344, 4
          %s1355 = int_to_ptr.vmem [resolvable:$true] %s1354
          %1357 = dma.vmem_to_hbm [thread:$0]  %s1355, 128, %s1352, %s1341
        $region84: #{tpu_custom_call.1} parent=55 // pred_fallthru
          _
      $region56: #{tpu_custom_call.1} parent=5 // pred_fallthru
        _
      %p1358 = scmp.le.s32.totalorder 2, %s24
      // Predicated region
      $region85: #{tpu_custom_call.1} parent=5 // pred_check
        %p1359 = pneg %p1358
      $region86: #{tpu_custom_call.1} parent=5 // pred_check_branch
        %1361 = sbr.rel (%p1359) target = $region88
      $region87: #{tpu_custom_call.1} parent=5 // pred_region
        %s1362 = ssub.s32 %s24, 2
        // Predicated region
        $region89: #{tpu_custom_call.1} parent=87 // pred_check
          %p1363 = pneg %p247
        $region90: #{tpu_custom_call.1} parent=87 // pred_check_branch
          %1365 = sbr.rel (%p1363) target = $region92
        $region91: #{tpu_custom_call.1} parent=87 // pred_region
          %s1366 = sand.u32 %s232, 1
          %s1367 = scalar_lea.sflag [#allocation4], %s1366
          %s1368 = sand.u32 %s232, 1
          %s1369 = smul.addr %s1368, 8
          %s1370 = scalar_lea.vmem [#allocation13], %s1369
          %1371 = dma.done %s1367, 128
        $region92: #{tpu_custom_call.1} parent=87 // pred_fallthru
          _
      $region88: #{tpu_custom_call.1} parent=5 // pred_fallthru
        _
    $region6: #{tpu_custom_call.1} parent=1 // loop_footer
      %s28 = sadd.s32 1, %s24
    $region7: #{tpu_custom_call.1} parent=1 // loop_footer_branch
      %23 = sbr.rel target = $region3
    $region8: #{tpu_custom_call.1} parent=1 // loop_exit
      _
    %1372 = vsyncpa [#allocation3], 1
    %s1373 = scalar_lea.sflag [#allocation3], 1
    %1374 = vsyncpa %s1373, 1
    %1375 = vsyncpa [#allocation6], 1
    %1376 = vsyncpa [#allocation9], 1
    %1377 = vsyncpa [#allocation12], 1
    %1378 = vsyncpa [#allocation4], 1
    %s1379 = scalar_lea.sflag [#allocation4], 1
    %1380 = vsyncpa %s1379, 1

// kernel: tpu_custom_call.1
$region0: #{tpu_custom_call.1}
  #allocation0 [shape = 'u32[]', space=smem, size = 0x4, offset = 0x4, fixed_abs, tag = 'smem constant byte address 0x4 - core index']
  #allocation1 [shape = 'u32[144,128]{1,0:T(1,128)}', space=vmem, size = 0x12000, scoped, tag = 'internal scratch']
  %s0 = inlined_call_operand.hbm [shape: bf16[16,256], index: 0, kind: input, shape index: {}]
  %s1 = inlined_call_operand.hbm [shape: bf16[256,128], index: 1, kind: input, shape index: {}]
  %s2 = inlined_call_operand.hbm [shape: f32[8,128], index: 2, kind: input, shape index: {}]
  %s3 = inlined_call_operand.hbm [shape: bf16[128,512], index: 3, kind: input, shape index: {}]
  %s4 = inlined_call_operand.vmem [shape: f32[1,512], index: 4, kind: input, shape index: {}]
  %s5 = inlined_call_operand.vmem [shape: f32[1,512], index: 5, kind: input, shape index: {}]
  %s6 = inlined_call_operand.hbm [shape: f32[1,512], index: 6, kind: input, shape index: {}]
  %s7 = inlined_call_operand.hbm [shape: bf16[512,128], index: 7, kind: input, shape index: {}]
  %s8 = inlined_call_operand.vmem [shape: f32[1,128], index: 8, kind: input, shape index: {}]
  %s9 = inlined_call_operand.hbm [shape: f32[16,128], index: 9, kind: output, shape index: {}]
  %s10 = sld [smem:[#allocation0]]
  $region93: #{tpu_custom_call.1} parent=0
    _
  %s12 = ssub.s32 1, %s10
  %s13 = scalar_select 0, %s12, %s10
  $region1: #{tpu_custom_call.1} parent=0
    #allocation2 [shape = 'u8[8192]{0}', space=vmem, size = 0x2000, scoped, tag = 'input window, operand 0']
    #allocation3 [shape = 's32[2]{0}', space=sflag, size = 0x8, scoped, tag = 'scoped memory for tpu_custom_call.1']
    #allocation4 [shape = 's32[2]{0}', space=sflag, size = 0x8, scoped, tag = 'scoped memory for tpu_custom_call.1']
    #allocation5 [shape = 'u8[65536]{0}', space=vmem, size = 0x10000, scoped, tag = 'input window, operand 1, single buffered']
    #allocation6 [shape = 's32[1]{0}', space=sflag, size = 0x4, scoped, tag = 'scoped memory for tpu_custom_call.1']
    #allocation7 [shape = 'u8[4096]{0}', space=vmem, size = 0x1000, scoped, tag = 'input window, operand 2, single buffered']
    #allocation8 [shape = 'u8[131072]{0}', space=vmem, size = 0x20000, scoped, tag = 'input window, operand 3, single buffered']
    #allocation9 [shape = 's32[1]{0}', space=sflag, size = 0x4, scoped, tag = 'scoped memory for tpu_custom_call.1']
    #allocation10 [shape = 'u8[2048]{0}', space=vmem, size = 0x800, scoped, tag = 'input window, operand 6, single buffered']
    #allocation11 [shape = 'u8[131072]{0}', space=vmem, size = 0x20000, scoped, tag = 'input window, operand 7, single buffered']
    #allocation12 [shape = 's32[1]{0}', space=sflag, size = 0x4, scoped, tag = 'scoped memory for tpu_custom_call.1']
    #allocation13 [shape = 'u8[8192]{0}', space=vmem, size = 0x2000, scoped, tag = 'output window, operand 0']
    %14 = vsyncpa [#allocation3], 0
    %s15 = scalar_lea.sflag [#allocation3], 1
    %16 = vsyncpa %s15, 0
    %17 = vsyncpa [#allocation6], 0
    %18 = vsyncpa [#allocation9], 0
    %19 = vsyncpa [#allocation12], 0
    %20 = vsyncpa [#allocation4], 0
    %s21 = scalar_lea.sflag [#allocation4], 1
    %22 = vsyncpa %s21, 0
    loop: start=0, step=1, limit=4
    $region2: #{tpu_custom_call.1} parent=1 // loop_pre_header
      _
    $region3: #{tpu_custom_call.1} parent=1 // loop_header
      %s24 = sphi 0, %s28
      %p25 = scmp.ge.s32.totalorder %s24, 4
      %s34 = sphi 0, %s36
      %s37 = sphi 0, %s34
      %s38 = sphi 0, %s37
      %s54 = sphi 0, %s38
      %s58 = sphi 0, %s58
      %s60 = sphi 0, %s58
      %s61 = sphi 0, %s60
      %s75 = sphi 0, %s61
      %s79 = sphi 0, %s79
      %s81 = sphi 0, %s79
      %s82 = sphi 0, %s81
      %s96 = sphi 0, %s82
      %s100 = sphi 0, %s100
      %s102 = sphi 0, %s100
      %s103 = sphi 0, %s102
      %s117 = sphi 0, %s103
      %s121 = sphi 0, %s121
      %s123 = sphi 0, %s121
      %s124 = sphi 0, %s123
      %s138 = sphi 0, %s124
      %s142 = sphi 0, %s142
      %s144 = sphi 0, %s142
      %s145 = sphi 0, %s144
      %s159 = sphi 0, %s145
      %s163 = sphi 0, %s163
      %s165 = sphi 0, %s163
      %s166 = sphi 0, %s165
      %s180 = sphi 0, %s166
      %s184 = sphi 0, %s184
      %s186 = sphi 0, %s184
      %s187 = sphi 0, %s186
      %s201 = sphi 0, %s187
      %s205 = sphi 0, %s205
      %s207 = sphi 0, %s205
      %s208 = sphi 0, %s207
      %s222 = sphi 0, %s208
      %s228 = sphi 0, %s230
      %s231 = sphi 0, %s228
      %s232 = sphi 0, %s231
      %s248 = sphi 0, %s232
    $region4: #{tpu_custom_call.1} parent=1 // loop_header_branch
      %27 = sbr.rel (%p25) target = $region8
    $region5: #{tpu_custom_call.1} parent=1 // loop_body
      %s29 = ssub.s32 %s24, 1
      %s30 = ssub.s32 %s24, 2
      %s31 = sadd.s32 %s24, 1
      %s32 = ssub.s32 %s24, %s31
      %p33 = scmp.eq.s32.totalorder %s32, 0
      %s35 = sadd.s32 %s34, 1
      %s36 = scalar_select %p33, %s34, %s35
      %p39 = pneg %p33
      %p40 = scmp.eq.s32.totalorder %s24, 1
      %p41 = por %p39, %p40
      %p42 = scmp.ne.s32.totalorder %s34, %s37
      %p43 = scmp.eq.s32.totalorder %s24, 0
      %p44 = por %p42, %p43
      %p45 = scmp.ne.s32.totalorder %s34, %s37
      %p46 = scmp.eq.s32.totalorder %s29, 1
      %p47 = por %p45, %p46
      %p48 = scmp.ne.s32.totalorder %s37, %s38
      %p49 = scmp.eq.s32.totalorder %s29, 0
      %p50 = por %p48, %p49
      %p51 = scmp.ne.s32.totalorder %s37, %s38
      %p52 = scmp.eq.s32.totalorder %s30, 1
      %p53 = por %p51, %p52
      %p55 = scmp.ne.s32.totalorder %s38, %s54
      %p56 = scmp.eq.s32.totalorder %s30, 0
      %p57 = por %p55, %p56
      %s59 = sadd.s32 %s58, 1
      %p62 = scmp.eq.s32.totalorder %s24, 1
      %p63 = scmp.ne.s32.totalorder %s58, %s60
      %p64 = scmp.eq.s32.totalorder %s24, 0
      %p65 = por %p63, %p64
      %p66 = scmp.ne.s32.totalorder %s58, %s60
      %p67 = scmp.eq.s32.totalorder %s29, 1
      %p68 = por %p66, %p67
      %p69 = scmp.ne.s32.totalorder %s60, %s61
      %p70 = scmp.eq.s32.totalorder %s29, 0
      %p71 = por %p69, %p70
      %p72 = scmp.ne.s32.totalorder %s60, %s61
      %p73 = scmp.eq.s32.totalorder %s30, 1
      %p74 = por %p72, %p73
      %p76 = scmp.ne.s32.totalorder %s61, %s75
      %p77 = scmp.eq.s32.totalorder %s30, 0
      %p78 = por %p76, %p77
      %s80 = sadd.s32 %s79, 1
      %p83 = scmp.eq.s32.totalorder %s24, 1
      %p84 = scmp.ne.s32.totalorder %s79, %s81
      %p85 = scmp.eq.s32.totalorder %s24, 0
      %p86 = por %p84, %p85
      %p87 = scmp.ne.s32.totalorder %s79, %s81
      %p88 = scmp.eq.s32.totalorder %s29, 1
      %p89 = por %p87, %p88
      %p90 = scmp.ne.s32.totalorder %s81, %s82
      %p91 = scmp.eq.s32.totalorder %s29, 0
      %p92 = por %p90, %p91
      %p93 = scmp.ne.s32.totalorder %s81, %s82
      %p94 = scmp.eq.s32.totalorder %s30, 1
      %p95 = por %p93, %p94
      %p97 = scmp.ne.s32.totalorder %s82, %s96
      %p98 = scmp.eq.s32.totalorder %s30, 0
      %p99 = por %p97, %p98
      %s101 = sadd.s32 %s100, 1
      %p104 = scmp.eq.s32.totalorder %s24, 1
      %p105 = scmp.ne.s32.totalorder %s100, %s102
      %p106 = scmp.eq.s32.totalorder %s24, 0
      %p107 = por %p105, %p106
      %p108 = scmp.ne.s32.totalorder %s100, %s102
      %p109 = scmp.eq.s32.totalorder %s29, 1
      %p110 = por %p108, %p109
      %p111 = scmp.ne.s32.totalorder %s102, %s103
      %p112 = scmp.eq.s32.totalorder %s29, 0
      %p113 = por %p111, %p112
      %p114 = scmp.ne.s32.totalorder %s102, %s103
      %p115 = scmp.eq.s32.totalorder %s30, 1
      %p116 = por %p114, %p115
      %p118 = scmp.ne.s32.totalorder %s103, %s117
      %p119 = scmp.eq.s32.totalorder %s30, 0
      %p120 = por %p118, %p119
      %s122 = sadd.s32 %s121, 1
      %p125 = scmp.eq.s32.totalorder %s24, 1
      %p126 = scmp.ne.s32.totalorder %s121, %s123
      %p127 = scmp.eq.s32.totalorder %s24, 0
      %p128 = por %p126, %p127
      %p129 = scmp.ne.s32.totalorder %s121, %s123
      %p130 = scmp.eq.s32.totalorder %s29, 1
      %p131 = por %p129, %p130
      %p132 = scmp.ne.s32.totalorder %s123, %s124
      %p133 = scmp.eq.s32.totalorder %s29, 0
      %p134 = por %p132, %p133
      %p135 = scmp.ne.s32.totalorder %s123, %s124
      %p136 = scmp.eq.s32.totalorder %s30, 1
      %p137 = por %p135, %p136
      %p139 = scmp.ne.s32.totalorder %s124, %s138
      %p140 = scmp.eq.s32.totalorder %s30, 0
      %p141 = por %p139, %p140
      %s143 = sadd.s32 %s142, 1
      %p146 = scmp.eq.s32.totalorder %s24, 1
      %p147 = scmp.ne.s32.totalorder %s142, %s144
      %p148 = scmp.eq.s32.totalorder %s24, 0
      %p149 = por %p147, %p148
      %p150 = scmp.ne.s32.totalorder %s142, %s144
      %p151 = scmp.eq.s32.totalorder %s29, 1
      %p152 = por %p150, %p151
      %p153 = scmp.ne.s32.totalorder %s144, %s145
      %p154 = scmp.eq.s32.totalorder %s29, 0
      %p155 = por %p153, %p154
      %p156 = scmp.ne.s32.totalorder %s144, %s145
      %p157 = scmp.eq.s32.totalorder %s30, 1
      %p158 = por %p156, %p157
      %p160 = scmp.ne.s32.totalorder %s145, %s159
      %p161 = scmp.eq.s32.totalorder %s30, 0
      %p162 = por %p160, %p161
      %s164 = sadd.s32 %s163, 1
      %p167 = scmp.eq.s32.totalorder %s24, 1
      %p168 = scmp.ne.s32.totalorder %s163, %s165
      %p169 = scmp.eq.s32.totalorder %s24, 0
      %p170 = por %p168, %p169
      %p171 = scmp.ne.s32.totalorder %s163, %s165
      %p172 = scmp.eq.s32.totalorder %s29, 1
      %p173 = por %p171, %p172
      %p174 = scmp.ne.s32.totalorder %s165, %s166
      %p175 = scmp.eq.s32.totalorder %s29, 0
      %p176 = por %p174, %p175
      %p177 = scmp.ne.s32.totalorder %s165, %s166
      %p178 = scmp.eq.s32.totalorder %s30, 1
      %p179 = por %p177, %p178
      %p181 = scmp.ne.s32.totalorder %s166, %s180
      %p182 = scmp.eq.s32.totalorder %s30, 0
      %p183 = por %p181, %p182
      %s185 = sadd.s32 %s184, 1
      %p188 = scmp.eq.s32.totalorder %s24, 1
      %p189 = scmp.ne.s32.totalorder %s184, %s186
      %p190 = scmp.eq.s32.totalorder %s24, 0
      %p191 = por %p189, %p190
      %p192 = scmp.ne.s32.totalorder %s184, %s186
      %p193 = scmp.eq.s32.totalorder %s29, 1
      %p194 = por %p192, %p193
      %p195 = scmp.ne.s32.totalorder %s186, %s187
      %p196 = scmp.eq.s32.totalorder %s29, 0
      %p197 = por %p195, %p196
      %p198 = scmp.ne.s32.totalorder %s186, %s187
      %p199 = scmp.eq.s32.totalorder %s30, 1
      %p200 = por %p198, %p199
      %p202 = scmp.ne.s32.totalorder %s187, %s201
      %p203 = scmp.eq.s32.totalorder %s30, 0
      %p204 = por %p202, %p203
      %s206 = sadd.s32 %s205, 1
      %p209 = scmp.eq.s32.totalorder %s24, 1
      %p210 = scmp.ne.s32.totalorder %s205, %s207
      %p211 = scmp.eq.s32.totalorder %s24, 0
      %p212 = por %p210, %p211
      %p213 = scmp.ne.s32.totalorder %s205, %s207
      %p214 = scmp.eq.s32.totalorder %s29, 1
      %p215 = por %p213, %p214
      %p216 = scmp.ne.s32.totalorder %s207, %s208
      %p217 = scmp.eq.s32.totalorder %s29, 0
      %p218 = por %p216, %p217
      %p219 = scmp.ne.s32.totalorder %s207, %s208
      %p220 = scmp.eq.s32.totalorder %s30, 1
      %p221 = por %p219, %p220
      %p223 = scmp.ne.s32.totalorder %s208, %s222
      %p224 = scmp.eq.s32.totalorder %s30, 0
      %p225 = por %p223, %p224
      %s226 = ssub.s32 %s24, %s31
      %p227 = scmp.eq.s32.totalorder %s226, 0
      %s229 = sadd.s32 %s228, 1
      %s230 = scalar_select %p227, %s228, %s229
      %p233 = pneg %p227
      %p234 = scmp.eq.s32.totalorder %s24, 1
      %p235 = por %p233, %p234
      %p236 = scmp.ne.s32.totalorder %s228, %s231
      %p237 = scmp.eq.s32.totalorder %s24, 0
      %p238 = por %p236, %p237
      %p239 = scmp.ne.s32.totalorder %s228, %s231
      %p240 = scmp.eq.s32.totalorder %s29, 1
      %p241 = por %p239, %p240
      %p242 = scmp.ne.s32.totalorder %s231, %s232
      %p243 = scmp.eq.s32.totalorder %s29, 0
      %p244 = por %p242, %p243
      %p245 = scmp.ne.s32.totalorder %s231, %s232
      %p246 = scmp.eq.s32.totalorder %s30, 1
      %p247 = por %p245, %p246
      %p249 = scmp.ne.s32.totalorder %s232, %s248
      %p250 = scmp.eq.s32.totalorder %s30, 0
      %p251 = por %p249, %p250
      %p252 = scmp.le.s32.totalorder 1, %s24
      %p253 = scmp.lt.s32.totalorder %s24, 3
      %p254 = pnand %p252, %p253
      %p255 = pneg %p254
      // Predicated region
      $region9: #{tpu_custom_call.1} parent=5 // pred_check
        _
      $region10: #{tpu_custom_call.1} parent=5 // pred_check_branch
        %257 = sbr.rel (%p254) target = $region12
      $region11: #{tpu_custom_call.1} parent=5 // pred_region
        %s258 = ssub.s32 %s24, 1
        // Predicated region
        $region13: #{tpu_custom_call.1} parent=11 // pred_check
          %p259 = pneg %p71
        $region14: #{tpu_custom_call.1} parent=11 // pred_check_branch
          %261 = sbr.rel (%p259) target = $region16
        $region15: #{tpu_custom_call.1} parent=11 // pred_region
          %s263 = ssub.s32 2048, 2048
          %264 = vsyncadd [#allocation6], %s263
          %s265 = sshll.u32 [#allocation5], 4
          %s266 = int_to_ptr.vmem [resolvable:$true] %s265
          %271 = dma.hbm_to_vmem [thread:$0]  %s1, 2048, %s266, [#allocation6], 64, 64, 4
        $region16: #{tpu_custom_call.1} parent=11 // pred_fallthru
          _
        // Predicated region
        $region17: #{tpu_custom_call.1} parent=11 // pred_check
          %p272 = pneg %p92
        $region18: #{tpu_custom_call.1} parent=11 // pred_check_branch
          %274 = sbr.rel (%p272) target = $region20
        $region19: #{tpu_custom_call.1} parent=11 // pred_region
          %s276 = ssub.s32 128, 128
          %277 = vsyncadd [#allocation6], %s276
          %s279 = sshll.u32 [#allocation7], 4
          %s280 = int_to_ptr.vmem [resolvable:$true] %s279
          %282 = dma.hbm_to_vmem [thread:$0]  %s2, 128, %s280, [#allocation6]
        $region20: #{tpu_custom_call.1} parent=11 // pred_fallthru
          _
        // Predicated region
        $region21: #{tpu_custom_call.1} parent=11 // pred_check
          %p283 = pneg %p113
        $region22: #{tpu_custom_call.1} parent=11 // pred_check_branch
          %285 = sbr.rel (%p283) target = $region24
        $region23: #{tpu_custom_call.1} parent=11 // pred_region
          %s287 = ssub.s32 4096, 4096
          %288 = vsyncadd [#allocation9], %s287
          %s289 = sshll.u32 [#allocation8], 4
          %s290 = int_to_ptr.vmem [resolvable:$true] %s289
          %295 = dma.hbm_to_vmem [thread:$0]  %s3, 4096, %s290, [#allocation9], 256, 256, 16
        $region24: #{tpu_custom_call.1} parent=11 // pred_fallthru
          _
        // Predicated region
        $region25: #{tpu_custom_call.1} parent=11 // pred_check
          %p296 = pneg %p134
        $region26: #{tpu_custom_call.1} parent=11 // pred_check_branch
          %298 = sbr.rel (%p296) target = $region28
        $region27: #{tpu_custom_call.1} parent=11 // pred_region
          _
        $region28: #{tpu_custom_call.1} parent=11 // pred_fallthru
          _
        // Predicated region
        $region29: #{tpu_custom_call.1} parent=11 // pred_check
          %p299 = pneg %p155
        $region30: #{tpu_custom_call.1} parent=11 // pred_check_branch
          %301 = sbr.rel (%p299) target = $region32
        $region31: #{tpu_custom_call.1} parent=11 // pred_region
          _
        $region32: #{tpu_custom_call.1} parent=11 // pred_fallthru
          _
        // Predicated region
        $region33: #{tpu_custom_call.1} parent=11 // pred_check
          %p302 = pneg %p176
        $region34: #{tpu_custom_call.1} parent=11 // pred_check_branch
          %304 = sbr.rel (%p302) target = $region36
        $region35: #{tpu_custom_call.1} parent=11 // pred_region
          %s306 = ssub.s32 64, 64
          %307 = vsyncadd [#allocation9], %s306
          %s309 = sshll.u32 [#allocation10], 4
          %s310 = int_to_ptr.vmem [resolvable:$true] %s309
          %312 = dma.hbm_to_vmem [thread:$0]  %s6, 64, %s310, [#allocation9]
        $region36: #{tpu_custom_call.1} parent=11 // pred_fallthru
          _
        // Predicated region
        $region37: #{tpu_custom_call.1} parent=11 // pred_check
          %p313 = pneg %p197
        $region38: #{tpu_custom_call.1} parent=11 // pred_check_branch
          %315 = sbr.rel (%p313) target = $region40
        $region39: #{tpu_custom_call.1} parent=11 // pred_region
          %s317 = ssub.s32 4096, 4096
          %318 = vsyncadd [#allocation12], %s317
          %s319 = sshll.u32 [#allocation11], 4
          %s320 = int_to_ptr.vmem [resolvable:$true] %s319
          %325 = dma.hbm_to_vmem [thread:$0]  %s7, 4096, %s320, [#allocation12], 64, 64, 4
        $region40: #{tpu_custom_call.1} parent=11 // pred_fallthru
          _
        // Predicated region
        $region41: #{tpu_custom_call.1} parent=11 // pred_check
          %p326 = pneg %p218
        $region42: #{tpu_custom_call.1} parent=11 // pred_check_branch
          %328 = sbr.rel (%p326) target = $region44
        $region43: #{tpu_custom_call.1} parent=11 // pred_region
          _
        $region44: #{tpu_custom_call.1} parent=11 // pred_fallthru
          _
      $region12: #{tpu_custom_call.1} parent=5 // pred_fallthru
        _
      %p329 = scmp.lt.s32.totalorder %s24, 2
      // Predicated region
      $region45: #{tpu_custom_call.1} parent=5 // pred_check
        %p330 = pneg %p329
      $region46: #{tpu_custom_call.1} parent=5 // pred_check_branch
        %332 = sbr.rel (%p330) target = $region48
      $region47: #{tpu_custom_call.1} parent=5 // pred_region
        // Predicated region
        $region49: #{tpu_custom_call.1} parent=47 // pred_check
          %p333 = pneg %p44
        $region50: #{tpu_custom_call.1} parent=47 // pred_check_branch
          %335 = sbr.rel (%p333) target = $region52
        $region51: #{tpu_custom_call.1} parent=47 // pred_region
          %s336 = sand.u32 %s34, 1
          %s337 = scalar_lea.sflag [#allocation3], %s336
          %s338 = sand.u32 %s34, 1
          %s339 = smul.addr %s338, 8
          %s340 = scalar_lea.vmem [#allocation2], %s339
          %s342 = ssub.s32 128, 128
          %343 = vsyncadd %s337, %s342
          %s344 = smul.addr %s24, 2
          %s345 = smul.addr %s344, 64
          %s346 = scalar_lea.hbm %s0, %s345
          %s348 = sshll.u32 %s340, 4
          %s349 = int_to_ptr.vmem [resolvable:$true] %s348
          %351 = dma.hbm_to_vmem [thread:$0]  %s346, 128, %s349, %s337
        $region52: #{tpu_custom_call.1} parent=47 // pred_fallthru
          _
      $region48: #{tpu_custom_call.1} parent=5 // pred_fallthru
        _
      %p352 = scmp.le.s32.totalorder 1, %s24
      %p353 = scmp.lt.s32.totalorder %s24, 3
      %p354 = pnand %p352, %p353
      %p355 = pneg %p354
      // Predicated region
      $region53: #{tpu_custom_call.1} parent=5 // pred_check
        _
      $region54: #{tpu_custom_call.1} parent=5 // pred_check_branch
        %357 = sbr.rel (%p354) target = $region56
      $region55: #{tpu_custom_call.1} parent=5 // pred_region
        %s358 = ssub.s32 %s24, 1
        %s359 = sand.u32 %s37, 1
        %s360 = scalar_lea.sflag [#allocation3], %s359
        %s361 = sand.u32 %s37, 1
        %s362 = smul.addr %s361, 8
        %s363 = scalar_lea.vmem [#allocation2], %s362
        // Predicated region
        $region57: #{tpu_custom_call.1} parent=55 // pred_check
          %p364 = pneg %p50
        $region58: #{tpu_custom_call.1} parent=55 // pred_check_branch
          %366 = sbr.rel (%p364) target = $region60
        $region59: #{tpu_custom_call.1} parent=55 // pred_region
          %367 = dma.done %s360, 128
        $region60: #{tpu_custom_call.1} parent=55 // pred_fallthru
          _
        // Predicated region
        $region61: #{tpu_custom_call.1} parent=55 // pred_check
          %p368 = pneg %p71
        $region62: #{tpu_custom_call.1} parent=55 // pred_check_branch
          %370 = sbr.rel (%p368) target = $region64
        $region63: #{tpu_custom_call.1} parent=55 // pred_region
          %371 = dma.done [#allocation6], 2048
        $region64: #{tpu_custom_call.1} parent=55 // pred_fallthru
          _
        // Predicated region
        $region65: #{tpu_custom_call.1} parent=55 // pred_check
          %p372 = pneg %p92
        $region66: #{tpu_custom_call.1} parent=55 // pred_check_branch
          %374 = sbr.rel (%p372) target = $region68
        $region67: #{tpu_custom_call.1} parent=55 // pred_region
          %375 = dma.done [#allocation6], 128
        $region68: #{tpu_custom_call.1} parent=55 // pred_fallthru
          _
        // Predicated region
        $region69: #{tpu_custom_call.1} parent=55 // pred_check
          %p376 = pneg %p113
        $region70: #{tpu_custom_call.1} parent=55 // pred_check_branch
          %378 = sbr.rel (%p376) target = $region72
        $region71: #{tpu_custom_call.1} parent=55 // pred_region
          %379 = dma.done [#allocation9], 4096
        $region72: #{tpu_custom_call.1} parent=55 // pred_fallthru
          _
        // Predicated region
        $region73: #{tpu_custom_call.1} parent=55 // pred_check
          %p380 = pneg %p176
        $region74: #{tpu_custom_call.1} parent=55 // pred_check_branch
          %382 = sbr.rel (%p380) target = $region76
        $region75: #{tpu_custom_call.1} parent=55 // pred_region
          %383 = dma.done [#allocation9], 64
        $region76: #{tpu_custom_call.1} parent=55 // pred_fallthru
          _
        // Predicated region
        $region77: #{tpu_custom_call.1} parent=55 // pred_check
          %p384 = pneg %p197
        $region78: #{tpu_custom_call.1} parent=55 // pred_check_branch
          %386 = sbr.rel (%p384) target = $region80
        $region79: #{tpu_custom_call.1} parent=55 // pred_region
          %387 = dma.done [#allocation12], 4096
        $region80: #{tpu_custom_call.1} parent=55 // pred_fallthru
          _
        %s388 = sand.u32 %s37, 1
        %s389 = scalar_lea.sflag [#allocation3], %s388
        %s390 = sand.u32 %s37, 1
        %s391 = smul.addr %s390, 8
        %s392 = scalar_lea.vmem [#allocation2], %s391
        %p393 = pneg %p50
        %p394 = pneg %p47
        %p395 = pneg %p71
        %p396 = pneg %p68
        %p397 = pneg %p92
        %p398 = pneg %p89
        %p399 = pneg %p113
        %p400 = pneg %p110
        %p401 = pneg %p134
        %p402 = pneg %p131
        %p403 = pneg %p155
        %p404 = pneg %p152
        %p405 = pneg %p176
        %p406 = pneg %p173
        %p407 = pneg %p197
        %p408 = pneg %p194
        %p409 = pneg %p218
        %p410 = pneg %p215
        %p411 = pneg %p244
        %p412 = pneg %p241
        %s413 = sand.u32 %s231, 1
        %s414 = scalar_lea.sflag [#allocation4], %s413
        %s415 = sand.u32 %s231, 1
        %s416 = smul.addr %s415, 8
        %s417 = scalar_lea.vmem [#allocation13], %s416
        %v419 = vld [vmem:[%s363] sm:$0xff]
        %v420 = vld [vmem:[#allocation5] sm:$0xf]
        %v421 = vld [vmem:[#allocation5 + $0x4] sm:$0xf]
        %v422 = vld [vmem:[#allocation5 + $0x8] sm:$0xf]
        %v423 = vld [vmem:[#allocation5 + $0xc] sm:$0xf]
        %v424 = vld [vmem:[#allocation5 + $0x10] sm:$0xf]
        %v425 = vld [vmem:[#allocation5 + $0x14] sm:$0xf]
        %v426 = vld [vmem:[#allocation5 + $0x18] sm:$0xf]
        %v427 = vld [vmem:[#allocation5 + $0x1c] sm:$0xf]
        %v428 = vld [vmem:[#allocation5 + $0x20] sm:$0xf]
        %v429 = vld [vmem:[#allocation5 + $0x24] sm:$0xf]
        %v430 = vld [vmem:[#allocation5 + $0x28] sm:$0xf]
        %v431 = vld [vmem:[#allocation5 + $0x2c] sm:$0xf]
        %v432 = vld [vmem:[#allocation5 + $0x30] sm:$0xf]
        %v433 = vld [vmem:[#allocation5 + $0x34] sm:$0xf]
        %v434 = vld [vmem:[#allocation5 + $0x38] sm:$0xf]
        %v435 = vld [vmem:[#allocation5 + $0x3c] sm:$0xf]
        %v436 = vld [vmem:[#allocation5 + $0x40] sm:$0xf]
        %v437 = vld [vmem:[#allocation5 + $0x44] sm:$0xf]
        %v438 = vld [vmem:[#allocation5 + $0x48] sm:$0xf]
        %v439 = vld [vmem:[#allocation5 + $0x4c] sm:$0xf]
        %v440 = vld [vmem:[#allocation5 + $0x50] sm:$0xf]
        %v441 = vld [vmem:[#allocation5 + $0x54] sm:$0xf]
        %v442 = vld [vmem:[#allocation5 + $0x58] sm:$0xf]
        %v443 = vld [vmem:[#allocation5 + $0x5c] sm:$0xf]
        %v444 = vld [vmem:[#allocation5 + $0x60] sm:$0xf]
        %v445 = vld [vmem:[#allocation5 + $0x64] sm:$0xf]
        %v446 = vld [vmem:[#allocation5 + $0x68] sm:$0xf]
        %v447 = vld [vmem:[#allocation5 + $0x6c] sm:$0xf]
        %v448 = vld [vmem:[#allocation5 + $0x70] sm:$0xf]
        %v449 = vld [vmem:[#allocation5 + $0x74] sm:$0xf]
        %v450 = vld [vmem:[#allocation5 + $0x78] sm:$0xf]
        %v451 = vld [vmem:[#allocation5 + $0x7c] sm:$0xf]
        %v452 = vld [vmem:[#allocation7] sm:$0xff]
        %v454 = vunpack.c.l.b16 %v419
        %v455 = vunpack.c.h.b16 %v419
        %v456 = vpack.c.b16 %v454, %v454
        %v457 = vpack.c.b16 %v455, %v455
        %v492 = vunpack.c.l.b16 %v420
        %v493 = vunpack.c.l.b16 %v421
        %v494 = vunpack.c.l.b16 %v422
        %v495 = vunpack.c.l.b16 %v423
        %v496 = vunpack.c.l.b16 %v424
        %v497 = vunpack.c.l.b16 %v425
        %v498 = vunpack.c.l.b16 %v426
        %v499 = vunpack.c.l.b16 %v427
        %v500 = vunpack.c.l.b16 %v428
        %v501 = vunpack.c.l.b16 %v429
        %v502 = vunpack.c.l.b16 %v430
        %v503 = vunpack.c.l.b16 %v431
        %v504 = vunpack.c.l.b16 %v432
        %v505 = vunpack.c.l.b16 %v433
        %v506 = vunpack.c.l.b16 %v434
        %v507 = vunpack.c.l.b16 %v435
        %v508 = vunpack.c.l.b16 %v436
        %v509 = vunpack.c.l.b16 %v437
        %v510 = vunpack.c.l.b16 %v438
        %v511 = vunpack.c.l.b16 %v439
        %v512 = vunpack.c.l.b16 %v440
        %v513 = vunpack.c.l.b16 %v441
        %v514 = vunpack.c.l.b16 %v442
        %v515 = vunpack.c.l.b16 %v443
        %v516 = vunpack.c.l.b16 %v444
        %v517 = vunpack.c.l.b16 %v445
        %v518 = vunpack.c.l.b16 %v446
        %v519 = vunpack.c.l.b16 %v447
        %v520 = vunpack.c.l.b16 %v448
        %v521 = vunpack.c.l.b16 %v449
        %v522 = vunpack.c.l.b16 %v450
        %v523 = vunpack.c.l.b16 %v451
        %v524 = vpack.c.b16 %v493, %v492
        %v525 = vpack.c.b16 %v495, %v494
        %v526 = vpack.c.b16 %v497, %v496
        %v527 = vpack.c.b16 %v499, %v498
        %v528 = vpack.c.b16 %v501, %v500
        %v529 = vpack.c.b16 %v503, %v502
        %v530 = vpack.c.b16 %v505, %v504
        %v531 = vpack.c.b16 %v507, %v506
        %v532 = vpack.c.b16 %v509, %v508
        %v533 = vpack.c.b16 %v511, %v510
        %v534 = vpack.c.b16 %v513, %v512
        %v535 = vpack.c.b16 %v515, %v514
        %v536 = vpack.c.b16 %v517, %v516
        %v537 = vpack.c.b16 %v519, %v518
        %v538 = vpack.c.b16 %v521, %v520
        %v539 = vpack.c.b16 %v523, %v522
        %556 = vmatprep.subr.bf16.mxu0 0
        %557 = vmatpush1.bf16.msra.mxu0 %v531
        %558 = vmatprep.subr.bf16.mxu0 0
        %559 = vmatpush1.bf16.msra.mxu0 %v530
        %560 = vmatprep.subr.bf16.mxu0 0
        %561 = vmatpush1.bf16.msra.mxu0 %v529
        %562 = vmatprep.subr.bf16.mxu0 0
        %563 = vmatpush1.bf16.msra.mxu0 %v528
        %564 = vmatprep.subr.bf16.mxu0 0
        %565 = vmatpush1.bf16.msra.mxu0 %v527
        %566 = vmatprep.subr.bf16.mxu0 0
        %567 = vmatpush1.bf16.msra.mxu0 %v526
        %568 = vmatprep.subr.bf16.mxu0 0
        %569 = vmatpush1.bf16.msra.mxu0 %v525
        %570 = vmatprep.subr.bf16.mxu0 0
        %571 = vmatpush1.bf16.msra.mxu0 %v524
        %572 = vmatprep.subr.bf16.mxu0 0
        %573 = vmatpush2.bf16.msra.mxu0 %v539
        %574 = vmatprep.subr.bf16.mxu0 0
        %575 = vmatpush2.bf16.msra.mxu0 %v538
        %576 = vmatprep.subr.bf16.mxu0 0
        %577 = vmatpush2.bf16.msra.mxu0 %v537
        %578 = vmatprep.subr.bf16.mxu0 0
        %579 = vmatpush2.bf16.msra.mxu0 %v536
        %580 = vmatprep.subr.bf16.mxu0 0
        %581 = vmatpush2.bf16.msra.mxu0 %v535
        %582 = vmatprep.subr.bf16.mxu0 0
        %583 = vmatpush2.bf16.msra.mxu0 %v534
        %584 = vmatprep.subr.bf16.mxu0 0
        %585 = vmatpush2.bf16.msra.mxu0 %v533
        %586 = vmatprep.subr.bf16.mxu0 0
        %587 = vmatpush2.bf16.msra.mxu0 %v532
        %588 = vmatprep.mubr.bf16.mxu0 %v457
        %589 = vmatmul.mubr.bf16.gmra.mxu0 %v456
        %v590 = vpop.f32.mrf.mxu0
        %v591 = vadd.f32 %v452, %v590
        %v592 = vpop.f32.mrf.mxu0
        %v593 = vpop.f32.mrf.mxu0
        %v594 = vpop.f32.mrf.mxu0
        %595 = vdwg.mxu0
        %v596 = vpack.c.bf16 %v591, %v591
        %v597 = vld [vmem:[#allocation8] sm:$0xff]
        %v598 = vld [vmem:[#allocation8 + $0x8] sm:$0xff]
        %v599 = vld [vmem:[#allocation8 + $0x10] sm:$0xff]
        %v600 = vld [vmem:[#allocation8 + $0x18] sm:$0xff]
        %v601 = vld [vmem:[#allocation8 + $0x20] sm:$0xff]
        %v602 = vld [vmem:[#allocation8 + $0x28] sm:$0xff]
        %v603 = vld [vmem:[#allocation8 + $0x30] sm:$0xff]
        %v604 = vld [vmem:[#allocation8 + $0x38] sm:$0xff]
        %v605 = vld [vmem:[#allocation8 + $0x40] sm:$0xff]
        %v606 = vld [vmem:[#allocation8 + $0x48] sm:$0xff]
        %v607 = vld [vmem:[#allocation8 + $0x50] sm:$0xff]
        %v608 = vld [vmem:[#allocation8 + $0x58] sm:$0xff]
        %v609 = vld [vmem:[#allocation8 + $0x60] sm:$0xff]
        %v610 = vld [vmem:[#allocation8 + $0x68] sm:$0xff]
        %v611 = vld [vmem:[#allocation8 + $0x70] sm:$0xff]
        %v612 = vld [vmem:[#allocation8 + $0x78] sm:$0xff]
        %v613 = vld [vmem:[#allocation8 + $0x80] sm:$0xff]
        %v614 = vld [vmem:[#allocation8 + $0x88] sm:$0xff]
        %v615 = vld [vmem:[#allocation8 + $0x90] sm:$0xff]
        %v616 = vld [vmem:[#allocation8 + $0x98] sm:$0xff]
        %v617 = vld [vmem:[#allocation8 + $0xa0] sm:$0xff]
        %v618 = vld [vmem:[#allocation8 + $0xa8] sm:$0xff]
        %v619 = vld [vmem:[#allocation8 + $0xb0] sm:$0xff]
        %v620 = vld [vmem:[#allocation8 + $0xb8] sm:$0xff]
        %v621 = vld [vmem:[#allocation8 + $0xc0] sm:$0xff]
        %v622 = vld [vmem:[#allocation8 + $0xc8] sm:$0xff]
        %v623 = vld [vmem:[#allocation8 + $0xd0] sm:$0xff]
        %v624 = vld [vmem:[#allocation8 + $0xd8] sm:$0xff]
        %v625 = vld [vmem:[#allocation8 + $0xe0] sm:$0xff]
        %v626 = vld [vmem:[#allocation8 + $0xe8] sm:$0xff]
        %v627 = vld [vmem:[#allocation8 + $0xf0] sm:$0xff]
        %v628 = vld [vmem:[#allocation8 + $0xf8] sm:$0xff]
        %v629 = vld [vmem:[%s4] sm:$0xf]
        %v631 = vlaneseq
        %v632 = vshrl.u32 %v631, 7
        %v633 = vsub.s32 0, %v632
        %v634 = vrot.slane %v629, %v633
        %v635 = vlaneseq
        %v636 = vshrl.u32 %v635, 7
        %v637 = vsub.s32 1, %v636
        %v638 = vrot.slane %v629, %v637
        %v639 = vlaneseq
        %v640 = vshrl.u32 %v639, 7
        %v641 = vsub.s32 2, %v640
        %v642 = vrot.slane %v629, %v641
        %v643 = vlaneseq
        %v644 = vshrl.u32 %v643, 7
        %v645 = vsub.s32 3, %v644
        %v646 = vrot.slane %v629, %v645
        %v683 = vunpack.c.l.b16 %v597
        %v684 = vunpack.c.h.b16 %v597
        %v685 = vunpack.c.l.b16 %v598
        %v686 = vunpack.c.h.b16 %v598
        %v687 = vunpack.c.l.b16 %v599
        %v688 = vunpack.c.h.b16 %v599
        %v689 = vunpack.c.l.b16 %v600
        %v690 = vunpack.c.h.b16 %v600
        %v691 = vunpack.c.l.b16 %v601
        %v692 = vunpack.c.h.b16 %v601
        %v693 = vunpack.c.l.b16 %v602
        %v694 = vunpack.c.h.b16 %v602
        %v695 = vunpack.c.l.b16 %v603
        %v696 = vunpack.c.h.b16 %v603
        %v697 = vunpack.c.l.b16 %v604
        %v698 = vunpack.c.h.b16 %v604
        %v699 = vunpack.c.l.b16 %v605
        %v700 = vunpack.c.h.b16 %v605
        %v701 = vunpack.c.l.b16 %v606
        %v702 = vunpack.c.h.b16 %v606
        %v703 = vunpack.c.l.b16 %v607
        %v704 = vunpack.c.h.b16 %v607
        %v705 = vunpack.c.l.b16 %v608
        %v706 = vunpack.c.h.b16 %v608
        %v707 = vunpack.c.l.b16 %v609
        %v708 = vunpack.c.h.b16 %v609
        %v709 = vunpack.c.l.b16 %v610
        %v710 = vunpack.c.h.b16 %v610
        %v711 = vunpack.c.l.b16 %v611
        %v712 = vunpack.c.h.b16 %v611
        %v713 = vunpack.c.l.b16 %v612
        %v714 = vunpack.c.h.b16 %v612
        %v715 = vunpack.c.l.b16 %v613
        %v716 = vunpack.c.h.b16 %v613
        %v717 = vunpack.c.l.b16 %v614
        %v718 = vunpack.c.h.b16 %v614
        %v719 = vunpack.c.l.b16 %v615
        %v720 = vunpack.c.h.b16 %v615
        %v721 = vunpack.c.l.b16 %v616
        %v722 = vunpack.c.h.b16 %v616
        %v723 = vunpack.c.l.b16 %v617
        %v724 = vunpack.c.h.b16 %v617
        %v725 = vunpack.c.l.b16 %v618
        %v726 = vunpack.c.h.b16 %v618
        %v727 = vunpack.c.l.b16 %v619
        %v728 = vunpack.c.h.b16 %v619
        %v729 = vunpack.c.l.b16 %v620
        %v730 = vunpack.c.h.b16 %v620
        %v731 = vunpack.c.l.b16 %v621
        %v732 = vunpack.c.h.b16 %v621
        %v733 = vunpack.c.l.b16 %v622
        %v734 = vunpack.c.h.b16 %v622
        %v735 = vunpack.c.l.b16 %v623
        %v736 = vunpack.c.h.b16 %v623
        %v737 = vunpack.c.l.b16 %v624
        %v738 = vunpack.c.h.b16 %v624
        %v739 = vunpack.c.l.b16 %v625
        %v740 = vunpack.c.h.b16 %v625
        %v741 = vunpack.c.l.b16 %v626
        %v742 = vunpack.c.h.b16 %v626
        %v743 = vunpack.c.l.b16 %v627
        %v744 = vunpack.c.h.b16 %v627
        %v745 = vunpack.c.l.b16 %v628
        %v746 = vunpack.c.h.b16 %v628
        %v747 = vpack.c.b16 %v687, %v683
        %v748 = vpack.c.b16 %v688, %v684
        %v749 = vpack.c.b16 %v689, %v685
        %v750 = vpack.c.b16 %v690, %v686
        %v751 = vpack.c.b16 %v695, %v691
        %v752 = vpack.c.b16 %v696, %v692
        %v753 = vpack.c.b16 %v697, %v693
        %v754 = vpack.c.b16 %v698, %v694
        %v755 = vpack.c.b16 %v703, %v699
        %v756 = vpack.c.b16 %v704, %v700
        %v757 = vpack.c.b16 %v705, %v701
        %v758 = vpack.c.b16 %v706, %v702
        %v759 = vpack.c.b16 %v711, %v707
        %v760 = vpack.c.b16 %v712, %v708
        %v761 = vpack.c.b16 %v713, %v709
        %v762 = vpack.c.b16 %v714, %v710
        %v763 = vpack.c.b16 %v719, %v715
        %v764 = vpack.c.b16 %v720, %v716
        %v765 = vpack.c.b16 %v721, %v717
        %v766 = vpack.c.b16 %v722, %v718
        %v767 = vpack.c.b16 %v727, %v723
        %v768 = vpack.c.b16 %v728, %v724
        %v769 = vpack.c.b16 %v729, %v725
        %v770 = vpack.c.b16 %v730, %v726
        %v771 = vpack.c.b16 %v735, %v731
        %v772 = vpack.c.b16 %v736, %v732
        %v773 = vpack.c.b16 %v737, %v733
        %v774 = vpack.c.b16 %v738, %v734
        %v775 = vpack.c.b16 %v743, %v739
        %v776 = vpack.c.b16 %v744, %v740
        %v777 = vpack.c.b16 %v745, %v741
        %v778 = vpack.c.b16 %v746, %v742
        %811 = vmatprep.subr.bf16.mxu0 %v776
        %812 = vmatpush1.bf16.msra.mxu0 %v775
        %813 = vmatprep.subr.bf16.mxu0 %v772
        %814 = vmatpush1.bf16.msra.mxu0 %v771
        %815 = vmatprep.subr.bf16.mxu0 %v768
        %816 = vmatpush1.bf16.msra.mxu0 %v767
        %817 = vmatprep.subr.bf16.mxu0 %v764
        %818 = vmatpush1.bf16.msra.mxu0 %v763
        %819 = vmatprep.subr.bf16.mxu0 %v760
        %820 = vmatpush1.bf16.msra.mxu0 %v759
        %821 = vmatprep.subr.bf16.mxu0 %v756
        %822 = vmatpush1.bf16.msra.mxu0 %v755
        %823 = vmatprep.subr.bf16.mxu0 %v752
        %824 = vmatpush1.bf16.msra.mxu0 %v751
        %825 = vmatprep.subr.bf16.mxu0 %v748
        %826 = vmatpush1.bf16.msra.mxu0 %v747
        %827 = vmatprep.subr.bf16.mxu0 0
        %828 = vmatpush2.bf16.msra.mxu0 0
        %829 = vmatprep.subr.bf16.mxu0 0
        %830 = vmatpush2.bf16.msra.mxu0 0
        %831 = vmatprep.subr.bf16.mxu0 0
        %832 = vmatpush2.bf16.msra.mxu0 0
        %833 = vmatprep.subr.bf16.mxu0 0
        %834 = vmatpush2.bf16.msra.mxu0 0
        %835 = vmatprep.subr.bf16.mxu0 0
        %836 = vmatpush2.bf16.msra.mxu0 0
        %837 = vmatprep.subr.bf16.mxu0 0
        %838 = vmatpush2.bf16.msra.mxu0 0
        %839 = vmatprep.subr.bf16.mxu0 0
        %840 = vmatpush2.bf16.msra.mxu0 0
        %841 = vmatprep.subr.bf16.mxu0 0
        %842 = vmatpush2.bf16.msra.mxu0 0
        %843 = vmatprep.mubr.bf16.mxu0 0
        %844 = vmatmul.mubr.bf16.gmra.mxu0 %v596
        %v845 = vpop.f32.mrf.mxu0
        %v846 = vadd.f32 %v634, %v845
        %v847 = vpop.f32.mrf.mxu0
        %v848 = vadd.f32 %v638, %v847
        %v849 = vpop.f32.mrf.mxu0
        %v850 = vpop.f32.mrf.mxu0
        %851 = vdwg.mxu0
        %852 = vmatprep.subr.bf16.mxu0 %v778
        %853 = vmatpush1.bf16.msra.mxu0 %v777
        %854 = vmatprep.subr.bf16.mxu0 %v774
        %855 = vmatpush1.bf16.msra.mxu0 %v773
        %856 = vmatprep.subr.bf16.mxu0 %v770
        %857 = vmatpush1.bf16.msra.mxu0 %v769
        %858 = vmatprep.subr.bf16.mxu0 %v766
        %859 = vmatpush1.bf16.msra.mxu0 %v765
        %860 = vmatprep.subr.bf16.mxu0 %v762
        %861 = vmatpush1.bf16.msra.mxu0 %v761
        %862 = vmatprep.subr.bf16.mxu0 %v758
        %863 = vmatpush1.bf16.msra.mxu0 %v757
        %864 = vmatprep.subr.bf16.mxu0 %v754
        %865 = vmatpush1.bf16.msra.mxu0 %v753
        %866 = vmatprep.subr.bf16.mxu0 %v750
        %867 = vmatpush1.bf16.msra.mxu0 %v749
        %868 = vmatprep.subr.bf16.mxu0 0
        %869 = vmatpush2.bf16.msra.mxu0 0
        %870 = vmatprep.subr.bf16.mxu0 0
        %871 = vmatpush2.bf16.msra.mxu0 0
        %872 = vmatprep.subr.bf16.mxu0 0
        %873 = vmatpush2.bf16.msra.mxu0 0
        %874 = vmatprep.subr.bf16.mxu0 0
        %875 = vmatpush2.bf16.msra.mxu0 0
        %876 = vmatprep.subr.bf16.mxu0 0
        %877 = vmatpush2.bf16.msra.mxu0 0
        %878 = vmatprep.subr.bf16.mxu0 0
        %879 = vmatpush2.bf16.msra.mxu0 0
        %880 = vmatprep.subr.bf16.mxu0 0
        %881 = vmatpush2.bf16.msra.mxu0 0
        %882 = vmatprep.subr.bf16.mxu0 0
        %883 = vmatpush2.bf16.msra.mxu0 0
        %884 = vmatprep.mubr.bf16.mxu0 0
        %885 = vmatmul.mubr.bf16.gmra.mxu0 %v596
        %v886 = vpop.f32.mrf.mxu0
        %v887 = vadd.f32 %v642, %v886
        %v888 = vpop.f32.mrf.mxu0
        %v889 = vadd.f32 %v646, %v888
        %v890 = vpop.f32.mrf.mxu0
        %v891 = vpop.f32.mrf.mxu0
        %892 = vdwg.mxu0
        %v893 = vadd.f32 %v846, %v848
        %v894 = vadd.f32 %v893, %v887
        %v895 = vadd.f32 %v894, %v889
        %896 = vadd.xlane.f32.xlu0 %v895
        %v897 = vpop.xlane.xlu0 %896
        %v898 = vrcp.pop 512.0
        %v899 = vmul.f32 %v897, %v898
        %v900 = vsub.f32 %v846, %v899
        %v901 = vsub.f32 %v848, %v899
        %v902 = vsub.f32 %v887, %v899
        %v903 = vsub.f32 %v889, %v899
        %v904 = vmul.f32 %v900, %v900
        %v905 = vmul.f32 %v901, %v901
        %v906 = vmul.f32 %v902, %v902
        %v907 = vmul.f32 %v903, %v903
        %v908 = vadd.f32 %v904, %v905
        %v909 = vadd.f32 %v908, %v906
        %v910 = vadd.f32 %v909, %v907
        %911 = vadd.xlane.f32.xlu0 %v910
        %v912 = vpop.xlane.xlu0 %911
        %v913 = vmul.f32 %v912, %v898
        %v914 = vadd.f32 %v913, 1e-06
        %v915 = vrsqrt.pop %v914
        %v916 = vmul.f32 %v900, %v915
        %v917 = vmul.f32 %v901, %v915
        %v918 = vmul.f32 %v902, %v915
        %v919 = vmul.f32 %v903, %v915
        %v920 = vld [vmem:[%s5] sm:$0xf]
        %v922 = vlaneseq
        %v923 = vshrl.u32 %v922, 7
        %v924 = vsub.s32 0, %v923
        %v925 = vrot.slane %v920, %v924
        %v926 = vlaneseq
        %v927 = vshrl.u32 %v926, 7
        %v928 = vsub.s32 1, %v927
        %v929 = vrot.slane %v920, %v928
        %v930 = vlaneseq
        %v931 = vshrl.u32 %v930, 7
        %v932 = vsub.s32 2, %v931
        %v933 = vrot.slane %v920, %v932
        %v934 = vlaneseq
        %v935 = vshrl.u32 %v934, 7
        %v936 = vsub.s32 3, %v935
        %v937 = vrot.slane %v920, %v936
        %v942 = vmul.f32 %v916, %v925
        %v943 = vmul.f32 %v917, %v929
        %v944 = vmul.f32 %v918, %v933
        %v945 = vmul.f32 %v919, %v937
        %v946 = vld [vmem:[#allocation10] sm:$0xf]
        %v948 = vlaneseq
        %v949 = vshrl.u32 %v948, 7
        %v950 = vsub.s32 0, %v949
        %v951 = vrot.slane %v946, %v950
        %v952 = vlaneseq
        %v953 = vshrl.u32 %v952, 7
        %v954 = vsub.s32 1, %v953
        %v955 = vrot.slane %v946, %v954
        %v956 = vlaneseq
        %v957 = vshrl.u32 %v956, 7
        %v958 = vsub.s32 2, %v957
        %v959 = vrot.slane %v946, %v958
        %v960 = vlaneseq
        %v961 = vshrl.u32 %v960, 7
        %v962 = vsub.s32 3, %v961
        %v963 = vrot.slane %v946, %v962
        %v968 = vadd.f32 %v942, %v951
        %v969 = vadd.f32 %v943, %v955
        %v970 = vadd.f32 %v944, %v959
        %v971 = vadd.f32 %v945, %v963
        %v972 = vmul.f32 %v968, 0.5
        %v973 = vmul.f32 %v969, 0.5
        %v974 = vmul.f32 %v970, 0.5
        %v975 = vmul.f32 %v971, 0.5
        %v976 = vmul.f32 %v968, 0.70710677
        %v977 = vmul.f32 %v969, 0.70710677
        %v978 = vmul.f32 %v970, 0.70710677
        %v979 = vmul.f32 %v971, 0.70710677
        %v980 = verf.f32.pop %v976
        %v981 = verf.f32.pop %v977
        %v982 = verf.f32.pop %v978
        %v983 = verf.f32.pop %v979
        %v984 = vadd.f32 %v980, 1.0
        %v985 = vadd.f32 %v981, 1.0
        %v986 = vadd.f32 %v982, 1.0
        %v987 = vadd.f32 %v983, 1.0
        %v988 = vmul.f32 %v972, %v984
        %v989 = vmul.f32 %v973, %v985
        %v990 = vmul.f32 %v974, %v986
        %v991 = vmul.f32 %v975, %v987
        %v992 = vpack.c.bf16 %v988, %v988
        %v993 = vpack.c.bf16 %v989, %v989
        %v994 = vpack.c.bf16 %v990, %v990
        %v995 = vpack.c.bf16 %v991, %v991
        %v996 = vld [vmem:[#allocation11] sm:$0xf]
        %v997 = vld [vmem:[#allocation11 + $0x4] sm:$0xf]
        %v998 = vld [vmem:[#allocation11 + $0x8] sm:$0xf]
        %v999 = vld [vmem:[#allocation11 + $0xc] sm:$0xf]
        %v1000 = vld [vmem:[#allocation11 + $0x10] sm:$0xf]
        %v1001 = vld [vmem:[#allocation11 + $0x14] sm:$0xf]
        %v1002 = vld [vmem:[#allocation11 + $0x18] sm:$0xf]
        %v1003 = vld [vmem:[#allocation11 + $0x1c] sm:$0xf]
        %v1004 = vld [vmem:[#allocation11 + $0x20] sm:$0xf]
        %v1005 = vld [vmem:[#allocation11 + $0x24] sm:$0xf]
        %v1006 = vld [vmem:[#allocation11 + $0x28] sm:$0xf]
        %v1007 = vld [vmem:[#allocation11 + $0x2c] sm:$0xf]
        %v1008 = vld [vmem:[#allocation11 + $0x30] sm:$0xf]
        %v1009 = vld [vmem:[#allocation11 + $0x34] sm:$0xf]
        %v1010 = vld [vmem:[#allocation11 + $0x38] sm:$0xf]
        %v1011 = vld [vmem:[#allocation11 + $0x3c] sm:$0xf]
        %v1012 = vld [vmem:[#allocation11 + $0x40] sm:$0xf]
        %v1013 = vld [vmem:[#allocation11 + $0x44] sm:$0xf]
        %v1014 = vld [vmem:[#allocation11 + $0x48] sm:$0xf]
        %v1015 = vld [vmem:[#allocation11 + $0x4c] sm:$0xf]
        %v1016 = vld [vmem:[#allocation11 + $0x50] sm:$0xf]
        %v1017 = vld [vmem:[#allocation11 + $0x54] sm:$0xf]
        %v1018 = vld [vmem:[#allocation11 + $0x58] sm:$0xf]
        %v1019 = vld [vmem:[#allocation11 + $0x5c] sm:$0xf]
        %v1020 = vld [vmem:[#allocation11 + $0x60] sm:$0xf]
        %v1021 = vld [vmem:[#allocation11 + $0x64] sm:$0xf]
        %v1022 = vld [vmem:[#allocation11 + $0x68] sm:$0xf]
        %v1023 = vld [vmem:[#allocation11 + $0x6c] sm:$0xf]
        %v1024 = vld [vmem:[#allocation11 + $0x70] sm:$0xf]
        %v1025 = vld [vmem:[#allocation11 + $0x74] sm:$0xf]
        %v1026 = vld [vmem:[#allocation11 + $0x78] sm:$0xf]
        %v1027 = vld [vmem:[#allocation11 + $0x7c] sm:$0xf]
        %v1028 = vld [vmem:[#allocation11 + $0x80] sm:$0xf]
        %v1029 = vld [vmem:[#allocation11 + $0x84] sm:$0xf]
        %v1030 = vld [vmem:[#allocation11 + $0x88] sm:$0xf]
        %v1031 = vld [vmem:[#allocation11 + $0x8c] sm:$0xf]
        %v1032 = vld [vmem:[#allocation11 + $0x90] sm:$0xf]
        %v1033 = vld [vmem:[#allocation11 + $0x94] sm:$0xf]
        %v1034 = vld [vmem:[#allocation11 + $0x98] sm:$0xf]
        %v1035 = vld [vmem:[#allocation11 + $0x9c] sm:$0xf]
        %v1036 = vld [vmem:[#allocation11 + $0xa0] sm:$0xf]
        %v1037 = vld [vmem:[#allocation11 + $0xa4] sm:$0xf]
        %v1038 = vld [vmem:[#allocation11 + $0xa8] sm:$0xf]
        %v1039 = vld [vmem:[#allocation11 + $0xac] sm:$0xf]
        %v1040 = vld [vmem:[#allocation11 + $0xb0] sm:$0xf]
        %v1041 = vld [vmem:[#allocation11 + $0xb4] sm:$0xf]
        %v1042 = vld [vmem:[#allocation11 + $0xb8] sm:$0xf]
        %v1043 = vld [vmem:[#allocation11 + $0xbc] sm:$0xf]
        %v1044 = vld [vmem:[#allocation11 + $0xc0] sm:$0xf]
        %v1045 = vld [vmem:[#allocation11 + $0xc4] sm:$0xf]
        %v1046 = vld [vmem:[#allocation11 + $0xc8] sm:$0xf]
        %v1047 = vld [vmem:[#allocation11 + $0xcc] sm:$0xf]
        %v1048 = vld [vmem:[#allocation11 + $0xd0] sm:$0xf]
        %v1049 = vld [vmem:[#allocation11 + $0xd4] sm:$0xf]
        %v1050 = vld [vmem:[#allocation11 + $0xd8] sm:$0xf]
        %v1051 = vld [vmem:[#allocation11 + $0xdc] sm:$0xf]
        %v1052 = vld [vmem:[#allocation11 + $0xe0] sm:$0xf]
        %v1053 = vld [vmem:[#allocation11 + $0xe4] sm:$0xf]
        %v1054 = vld [vmem:[#allocation11 + $0xe8] sm:$0xf]
        %v1055 = vld [vmem:[#allocation11 + $0xec] sm:$0xf]
        %v1056 = vld [vmem:[#allocation11 + $0xf0] sm:$0xf]
        %v1057 = vld [vmem:[#allocation11 + $0xf4] sm:$0xf]
        %v1058 = vld [vmem:[#allocation11 + $0xf8] sm:$0xf]
        %v1059 = vld [vmem:[#allocation11 + $0xfc] sm:$0xf]
        %v1060 = vld [vmem:[%s8] sm:$0x1]
        %v1062 = vlaneseq
        %v1063 = vshrl.u32 %v1062, 7
        %v1064 = vsub.s32 0, %v1063
        %v1065 = vrot.slane %v1060, %v1064
        %v1131 = vunpack.c.l.b16 %v996
        %v1132 = vunpack.c.l.b16 %v997
        %v1133 = vunpack.c.l.b16 %v998
        %v1134 = vunpack.c.l.b16 %v999
        %v1135 = vunpack.c.l.b16 %v1000
        %v1136 = vunpack.c.l.b16 %v1001
        %v1137 = vunpack.c.l.b16 %v1002
        %v1138 = vunpack.c.l.b16 %v1003
        %v1139 = vunpack.c.l.b16 %v1004
        %v1140 = vunpack.c.l.b16 %v1005
        %v1141 = vunpack.c.l.b16 %v1006
        %v1142 = vunpack.c.l.b16 %v1007
        %v1143 = vunpack.c.l.b16 %v1008
        %v1144 = vunpack.c.l.b16 %v1009
        %v1145 = vunpack.c.l.b16 %v1010
        %v1146 = vunpack.c.l.b16 %v1011
        %v1147 = vunpack.c.l.b16 %v1012
        %v1148 = vunpack.c.l.b16 %v1013
        %v1149 = vunpack.c.l.b16 %v1014
        %v1150 = vunpack.c.l.b16 %v1015
        %v1151 = vunpack.c.l.b16 %v1016
        %v1152 = vunpack.c.l.b16 %v1017
        %v1153 = vunpack.c.l.b16 %v1018
        %v1154 = vunpack.c.l.b16 %v1019
        %v1155 = vunpack.c.l.b16 %v1020
        %v1156 = vunpack.c.l.b16 %v1021
        %v1157 = vunpack.c.l.b16 %v1022
        %v1158 = vunpack.c.l.b16 %v1023
        %v1159 = vunpack.c.l.b16 %v1024
        %v1160 = vunpack.c.l.b16 %v1025
        %v1161 = vunpack.c.l.b16 %v1026
        %v1162 = vunpack.c.l.b16 %v1027
        %v1163 = vunpack.c.l.b16 %v1028
        %v1164 = vunpack.c.l.b16 %v1029
        %v1165 = vunpack.c.l.b16 %v1030
        %v1166 = vunpack.c.l.b16 %v1031
        %v1167 = vunpack.c.l.b16 %v1032
        %v1168 = vunpack.c.l.b16 %v1033
        %v1169 = vunpack.c.l.b16 %v1034
        %v1170 = vunpack.c.l.b16 %v1035
        %v1171 = vunpack.c.l.b16 %v1036
        %v1172 = vunpack.c.l.b16 %v1037
        %v1173 = vunpack.c.l.b16 %v1038
        %v1174 = vunpack.c.l.b16 %v1039
        %v1175 = vunpack.c.l.b16 %v1040
        %v1176 = vunpack.c.l.b16 %v1041
        %v1177 = vunpack.c.l.b16 %v1042
        %v1178 = vunpack.c.l.b16 %v1043
        %v1179 = vunpack.c.l.b16 %v1044
        %v1180 = vunpack.c.l.b16 %v1045
        %v1181 = vunpack.c.l.b16 %v1046
        %v1182 = vunpack.c.l.b16 %v1047
        %v1183 = vunpack.c.l.b16 %v1048
        %v1184 = vunpack.c.l.b16 %v1049
        %v1185 = vunpack.c.l.b16 %v1050
        %v1186 = vunpack.c.l.b16 %v1051
        %v1187 = vunpack.c.l.b16 %v1052
        %v1188 = vunpack.c.l.b16 %v1053
        %v1189 = vunpack.c.l.b16 %v1054
        %v1190 = vunpack.c.l.b16 %v1055
        %v1191 = vunpack.c.l.b16 %v1056
        %v1192 = vunpack.c.l.b16 %v1057
        %v1193 = vunpack.c.l.b16 %v1058
        %v1194 = vunpack.c.l.b16 %v1059
        %v1195 = vpack.c.b16 %v1132, %v1131
        %v1196 = vpack.c.b16 %v1134, %v1133
        %v1197 = vpack.c.b16 %v1136, %v1135
        %v1198 = vpack.c.b16 %v1138, %v1137
        %v1199 = vpack.c.b16 %v1140, %v1139
        %v1200 = vpack.c.b16 %v1142, %v1141
        %v1201 = vpack.c.b16 %v1144, %v1143
        %v1202 = vpack.c.b16 %v1146, %v1145
        %v1203 = vpack.c.b16 %v1148, %v1147
        %v1204 = vpack.c.b16 %v1150, %v1149
        %v1205 = vpack.c.b16 %v1152, %v1151
        %v1206 = vpack.c.b16 %v1154, %v1153
        %v1207 = vpack.c.b16 %v1156, %v1155
        %v1208 = vpack.c.b16 %v1158, %v1157
        %v1209 = vpack.c.b16 %v1160, %v1159
        %v1210 = vpack.c.b16 %v1162, %v1161
        %v1211 = vpack.c.b16 %v1164, %v1163
        %v1212 = vpack.c.b16 %v1166, %v1165
        %v1213 = vpack.c.b16 %v1168, %v1167
        %v1214 = vpack.c.b16 %v1170, %v1169
        %v1215 = vpack.c.b16 %v1172, %v1171
        %v1216 = vpack.c.b16 %v1174, %v1173
        %v1217 = vpack.c.b16 %v1176, %v1175
        %v1218 = vpack.c.b16 %v1178, %v1177
        %v1219 = vpack.c.b16 %v1180, %v1179
        %v1220 = vpack.c.b16 %v1182, %v1181
        %v1221 = vpack.c.b16 %v1184, %v1183
        %v1222 = vpack.c.b16 %v1186, %v1185
        %v1223 = vpack.c.b16 %v1188, %v1187
        %v1224 = vpack.c.b16 %v1190, %v1189
        %v1225 = vpack.c.b16 %v1192, %v1191
        %v1226 = vpack.c.b16 %v1194, %v1193
        %1259 = vmatprep.subr.bf16.mxu0 0
        %1260 = vmatpush1.bf16.msra.mxu0 %v1202
        %1261 = vmatprep.subr.bf16.mxu0 0
        %1262 = vmatpush1.bf16.msra.mxu0 %v1201
        %1263 = vmatprep.subr.bf16.mxu0 0
        %1264 = vmatpush1.bf16.msra.mxu0 %v1200
        %1265 = vmatprep.subr.bf16.mxu0 0
        %1266 = vmatpush1.bf16.msra.mxu0 %v1199
        %1267 = vmatprep.subr.bf16.mxu0 0
        %1268 = vmatpush1.bf16.msra.mxu0 %v1198
        %1269 = vmatprep.subr.bf16.mxu0 0
        %1270 = vmatpush1.bf16.msra.mxu0 %v1197
        %1271 = vmatprep.subr.bf16.mxu0 0
        %1272 = vmatpush1.bf16.msra.mxu0 %v1196
        %1273 = vmatprep.subr.bf16.mxu0 0
        %1274 = vmatpush1.bf16.msra.mxu0 %v1195
        %1275 = vmatprep.subr.bf16.mxu0 0
        %1276 = vmatpush2.bf16.msra.mxu0 %v1210
        %1277 = vmatprep.subr.bf16.mxu0 0
        %1278 = vmatpush2.bf16.msra.mxu0 %v1209
        %1279 = vmatprep.subr.bf16.mxu0 0
        %1280 = vmatpush2.bf16.msra.mxu0 %v1208
        %1281 = vmatprep.subr.bf16.mxu0 0
        %1282 = vmatpush2.bf16.msra.mxu0 %v1207
        %1283 = vmatprep.subr.bf16.mxu0 0
        %1284 = vmatpush2.bf16.msra.mxu0 %v1206
        %1285 = vmatprep.subr.bf16.mxu0 0
        %1286 = vmatpush2.bf16.msra.mxu0 %v1205
        %1287 = vmatprep.subr.bf16.mxu0 0
        %1288 = vmatpush2.bf16.msra.mxu0 %v1204
        %1289 = vmatprep.subr.bf16.mxu0 0
        %1290 = vmatpush2.bf16.msra.mxu0 %v1203
        %1291 = vmatprep.mubr.bf16.mxu0 %v993
        %1292 = vmatmul.mubr.bf16.gmra.mxu0 %v992
        %v1293 = vpop.f32.mrf.mxu0
        %v1294 = vadd.f32 %v1065, %v1293
        %v1295 = vpop.f32.mrf.mxu0
        %v1296 = vpop.f32.mrf.mxu0
        %v1297 = vpop.f32.mrf.mxu0
        %1298 = vdwg.mxu0
        %1299 = vmatprep.subr.bf16.mxu0 0
        %1300 = vmatpush1.bf16.msra.mxu0 %v1218
        %1301 = vmatprep.subr.bf16.mxu0 0
        %1302 = vmatpush1.bf16.msra.mxu0 %v1217
        %1303 = vmatprep.subr.bf16.mxu0 0
        %1304 = vmatpush1.bf16.msra.mxu0 %v1216
        %1305 = vmatprep.subr.bf16.mxu0 0
        %1306 = vmatpush1.bf16.msra.mxu0 %v1215
        %1307 = vmatprep.subr.bf16.mxu0 0
        %1308 = vmatpush1.bf16.msra.mxu0 %v1214
        %1309 = vmatprep.subr.bf16.mxu0 0
        %1310 = vmatpush1.bf16.msra.mxu0 %v1213
        %1311 = vmatprep.subr.bf16.mxu0 0
        %1312 = vmatpush1.bf16.msra.mxu0 %v1212
        %1313 = vmatprep.subr.bf16.mxu0 0
        %1314 = vmatpush1.bf16.msra.mxu0 %v1211
        %1315 = vmatprep.subr.bf16.mxu0 0
        %1316 = vmatpush2.bf16.msra.mxu0 %v1226
        %1317 = vmatprep.subr.bf16.mxu0 0
        %1318 = vmatpush2.bf16.msra.mxu0 %v1225
        %1319 = vmatprep.subr.bf16.mxu0 0
        %1320 = vmatpush2.bf16.msra.mxu0 %v1224
        %1321 = vmatprep.subr.bf16.mxu0 0
        %1322 = vmatpush2.bf16.msra.mxu0 %v1223
        %1323 = vmatprep.subr.bf16.mxu0 0
        %1324 = vmatpush2.bf16.msra.mxu0 %v1222
        %1325 = vmatprep.subr.bf16.mxu0 0
        %1326 = vmatpush2.bf16.msra.mxu0 %v1221
        %1327 = vmatprep.subr.bf16.mxu0 0
        %1328 = vmatpush2.bf16.msra.mxu0 %v1220
        %1329 = vmatprep.subr.bf16.mxu0 0
        %1330 = vmatpush2.bf16.msra.mxu0 %v1219
        %1331 = vmatprep.mubr.bf16.mxu0 %v995
        %1332 = vmatmul.mubr.bf16.gmra.mxu0 %v994
        %v1333 = vpop.f32.mrf.mxu0
        %v1334 = vadd.f32 %v1294, %v1333
        %v1335 = vpop.f32.mrf.mxu0
        %v1336 = vpop.f32.mrf.mxu0
        %v1337 = vpop.f32.mrf.mxu0
        %1338 = vdwg.mxu0
        %1339 = vst [vmem:[%s417] sm:$0xff] %v1334
        %s1340 = sand.u32 %s231, 1
        %s1341 = scalar_lea.sflag [#allocation4], %s1340
        %s1342 = sand.u32 %s231, 1
        %s1343 = smul.addr %s1342, 8
        %s1344 = scalar_lea.vmem [#allocation13], %s1343
        // Predicated region
        $region81: #{tpu_custom_call.1} parent=55 // pred_check
          %p1345 = pneg %p241
        $region82: #{tpu_custom_call.1} parent=55 // pred_check_branch
          %1347 = sbr.rel (%p1345) target = $region84
        $region83: #{tpu_custom_call.1} parent=55 // pred_region
          %s1349 = ssub.s32 128, 128
          %1350 = vsyncadd %s1341, %s1349
          %s1351 = smul.addr %s29, 128
          %s1352 = scalar_lea.hbm %s9, %s1351
          %s1354 = sshll.u32 %s1344, 4
          %s1355 = int_to_ptr.vmem [resolvable:$true] %s1354
          %1357 = dma.vmem_to_hbm [thread:$0]  %s1355, 128, %s1352, %s1341
        $region84: #{tpu_custom_call.1} parent=55 // pred_fallthru
          _
      $region56: #{tpu_custom_call.1} parent=5 // pred_fallthru
        _
      %p1358 = scmp.le.s32.totalorder 2, %s24
      // Predicated region
      $region85: #{tpu_custom_call.1} parent=5 // pred_check
        %p1359 = pneg %p1358
      $region86: #{tpu_custom_call.1} parent=5 // pred_check_branch
        %1361 = sbr.rel (%p1359) target = $region88
      $region87: #{tpu_custom_call.1} parent=5 // pred_region
        %s1362 = ssub.s32 %s24, 2
        // Predicated region
        $region89: #{tpu_custom_call.1} parent=87 // pred_check
          %p1363 = pneg %p247
        $region90: #{tpu_custom_call.1} parent=87 // pred_check_branch
          %1365 = sbr.rel (%p1363) target = $region92
        $region91: #{tpu_custom_call.1} parent=87 // pred_region
          %s1366 = sand.u32 %s232, 1
          %s1367 = scalar_lea.sflag [#allocation4], %s1366
          %s1368 = sand.u32 %s232, 1
          %s1369 = smul.addr %s1368, 8
          %s1370 = scalar_lea.vmem [#allocation13], %s1369
          %1371 = dma.done %s1367, 128
        $region92: #{tpu_custom_call.1} parent=87 // pred_fallthru
          _
      $region88: #{tpu_custom_call.1} parent=5 // pred_fallthru
        _
    $region6: #{tpu_custom_call.1} parent=1 // loop_footer
      %s28 = sadd.s32 1, %s24
    $region7: #{tpu_custom_call.1} parent=1 // loop_footer_branch
      %23 = sbr.rel target = $region3
    $region8: #{tpu_custom_call.1} parent=1 // loop_exit
      _
    %1372 = vsyncpa [#allocation3], 1
    %s1373 = scalar_lea.sflag [#allocation3], 1
    %1374 = vsyncpa %s1373, 1
    %1375 = vsyncpa [#allocation6], 1
    %1376 = vsyncpa [#allocation9], 1
    %1377 = vsyncpa [#allocation12], 1
    %1378 = vsyncpa [#allocation4], 1
    %s1379 = scalar_lea.sflag [#allocation4], 1
    %1380 = vsyncpa %s1379, 1

</llo_original>
